<compile_context>
chip_gen: v7x
topology: tpu7x:2x2x1
jax: 0.10.0
libtpu: 0.0.40
codegen_flags: <defaults>
</compile_context>

<pallas_src>
import numpy as np
import jax
import jax.numpy as jnp
from jax.experimental import pallas as pl
from jax.experimental.pallas import tpu as pltpu

# ----------------------------- config (nerf_type='small') --------------------
L = 16                  # hash-grid levels
F = 2                   # features per level
LOG2_T = 15             # log2 hashmap size ('small')
T = 1 << LOG2_T
BASE_RES = 16
PER_LEVEL_SCALE = 1.5
POS_ENC_DIM = L * F     # 32
SH_DIM = 16             # degree-4 spherical harmonics
IN_DIM = POS_ENC_DIM + SH_DIM   # 48  (fused kernel input rows)
FEAT_DIM = 16           # density-MLP output dims
HIDDEN = 64

_PRIMES = np.array([1, 2654435761, 805459861], dtype=np.uint32)


# ----------------------------- SH degree-4 terms -----------------------------
def _sh4_terms(x, y, z):
    """16 spherical-harmonics basis terms (tcnn ordering), each shaped like x."""
    xx, yy, zz = x * x, y * y, z * z
    xy, yz, xz = x * y, y * z, x * z
    return [
        jnp.full_like(x, 0.28209479177387814),
        -0.48860251190291987 * y,
        0.48860251190291987 * z,
        -0.48860251190291987 * x,
        1.0925484305920792 * xy,
        -1.0925484305920792 * yz,
        0.94617469575755997 * zz - 0.31539156525251999,
        -1.0925484305920792 * xz,
        0.54627421529603959 * (xx - yy),
        0.59004358992664352 * y * (-3.0 * xx + yy),
        2.8906114426405538 * xy * z,
        0.45704579946446572 * y * (1.0 - 5.0 * zz),
        0.3731763325901154 * z * (5.0 * zz - 3.0),
        0.45704579946446572 * x * (1.0 - 5.0 * zz),
        1.4453057213202769 * z * (xx - yy),
        0.59004358992664352 * x * (-xx + 3.0 * yy),
    ]


def sh4_encode(viewdirs):
    """viewdirs in [0,1] (tcnn convention) -> (N,16) f32 SH-4 basis."""
    d = viewdirs * 2.0 - 1.0
    x, y, z = d[:, 0:1], d[:, 1:2], d[:, 2:3]
    return jnp.concatenate(_sh4_terms(x, y, z), axis=-1)


# ----------------------------- Pallas kernel ---------------------------------
def ngp_kernel(x_ref, w0d_ref, w1d_ref, w0c_ref, w1c_ref, w2c_ref, out_ref):
    """Transposed layout: every activation is (channels, tm); lanes = rays.

    x_ref : (48, tm) bf16  -> rows 0:32 hash-grid enc, rows 32:48 SH-4 basis
    weights are stored (out_dim, in_dim); out_ref : (4, tm) f32.
    """
    f32, bf16 = jnp.float32, jnp.bfloat16
    tm = x_ref.shape[1]

    xin = x_ref[...]                                   # (48, tm) bf16
    pe = xin[0:POS_ENC_DIM, :]                         # (32, tm)
    sh = xin[POS_ENC_DIM:IN_DIM, :]                    # (16, tm)

    # --- density MLP: 32 -> 64 (ReLU) -> 16 (ReLU); bf16 MXU, f32 accumulate --
    h = jnp.maximum(jnp.dot(w0d_ref[...], pe, preferred_element_type=f32), 0.0)        # (64, tm)
    feat = jnp.maximum(jnp.dot(w1d_ref[...], h.astype(bf16),
                               preferred_element_type=f32), 0.0)                        # (16, tm)
    sigma = feat[0:1, :]                                                                 # (1, tm)

    # --- color MLP: [feat; sh] (32, tm) -> 64 (ReLU) -> 64 (ReLU) -> 3 (Sigmoid)
    # single fused K=32 dot (sublane-aligned concat) instead of two K=16 dots + add
    xcat = jnp.concatenate([feat.astype(bf16), sh], axis=0)                              # (32, tm)
    hc = jnp.maximum(jnp.dot(w0c_ref[...], xcat, preferred_element_type=f32), 0.0)      # (64, tm)
    hc = jnp.maximum(jnp.dot(w1c_ref[...], hc.astype(bf16),
                             preferred_element_type=f32), 0.0)                          # (64, tm)
    # w2c is zero-padded to 4 output rows; row 3 is a dummy, overwritten with sigma
    logits = jnp.dot(w2c_ref[...], hc.astype(bf16), preferred_element_type=f32)         # (4, tm)
    rgb = jax.nn.sigmoid(logits)

    # lane-dense (4, tm) output tile: rows 0..2 = rgb, row 3 = sigma
    sub = jax.lax.broadcasted_iota(jnp.int32, (4, tm), 0)
    out_ref[...] = jnp.where(sub == 3, jnp.broadcast_to(sigma, (4, tm)),
                             rgb).astype(out_ref.dtype)


def instant_ngp_pallas(pos_enc, viewdirs, params, *, tm=1024):
    """pos_enc: (N,32) f32, viewdirs: (N,3) f32 in [0,1] -> (rgb (N,3), sigma (N,1))."""
    N = pos_enc.shape[0]
    bf16 = jnp.bfloat16

    # --- wrapper-side input packing: SH basis precomputed, single bf16 stream --
    sh = sh4_encode(viewdirs)                                          # (N,16) f32
    x_in = jnp.concatenate([pos_enc, sh], axis=-1).astype(bf16)        # (N,48) bf16

    # --- tile selection: big tiles amortize per-step overhead; keep the grid
    #     at >= 2 steps so v7x's two TensorCores both get work --------------
    while tm > 256 and pl.cdiv(N, tm) < 2:
        tm //= 2
    pad = (-N) % tm
    if pad:
        x_in = jnp.pad(x_in, ((0, pad), (0, 0)))
    Np = N + pad
    x_in_t = x_in.T                                                    # (48, Np): lanes = rays

    # --- weights, transposed to (out_dim, in_dim), bf16, pinned in VMEM -------
    w0d = params["w0d"].astype(bf16).T                                 # (64, 32)
    w1d = params["w1d"].astype(bf16).T                                 # (16, 64)
    w0c = params["w0c"].astype(bf16).T                                 # (64, 32)
    w1c = params["w1c"].astype(bf16).T                                 # (64, 64)
    w2c = jnp.pad(params["w2c"].astype(bf16).T, ((0, 1), (0, 0)))      # (4, 64), row 3 zero

    col = lambda i: (0, i)    # tiled over rays (lane axis)
    pin = lambda i: (0, 0)    # weights stay VMEM-resident

    out = pl.pallas_call(
        ngp_kernel,
        out_shape=jax.ShapeDtypeStruct((4, Np), jnp.float32),
        grid=(Np // tm,),
        in_specs=[
            pl.BlockSpec((IN_DIM, tm), col),             # fused [enc | sh] input
            pl.BlockSpec((HIDDEN, POS_ENC_DIM), pin),    # w0d
            pl.BlockSpec((FEAT_DIM, HIDDEN), pin),       # w1d
            pl.BlockSpec((HIDDEN, 2 * FEAT_DIM), pin),   # w0c (fused feat+sh)
            pl.BlockSpec((HIDDEN, HIDDEN), pin),         # w1c
            pl.BlockSpec((4, HIDDEN), pin),              # w2c (padded)
        ],
        out_specs=pl.BlockSpec((4, tm), col),
        compiler_params=pltpu.CompilerParams(
            dimension_semantics=("parallel",),
            vmem_limit_bytes=32 * 1024 * 1024),
    )(x_in_t, w0d, w1d, w0c, w1c, w2c)

    rgb = out[:3, :N].T                                                # (N,3)
    sigma = out[3:4, :N].T                                             # (N,1)
    return rgb, sigma


# ----------------------------- hash-grid encoding (plain JAX glue) -----------
# TODO(synk): fold this data-dependent gather + trilerp into the kernel (tables
# total ~4 MiB -> VMEM-resident); kept as JAX glue for now.
def level_params():
    scales, resolutions, sizes = [], [], []
    for l in range(L):
        scale = BASE_RES * (PER_LEVEL_SCALE ** l) - 1.0
        res = int(np.ceil(scale)) + 1
        sizes.append(min(res ** 3, T))
        scales.append(scale)
        resolutions.append(res)
    return scales, resolutions, sizes


def hash_grid_encode(pos, tables, scales, resolutions):
    """pos: (N,3) in [0,1] -> pos_enc (N, L*F): gathered + trilinear-interpolated."""
    offsets = np.array([[(c >> d) & 1 for d in range(3)] for c in range(8)],
                       dtype=np.int32)                               # (8,3)
    enc_levels = []
    for l in range(L):
        scale, res = scales[l], resolutions[l]
        p = pos * scale + 0.5
        p0 = jnp.floor(p)
        frac = p - p0
        base = p0.astype(jnp.int32)
        acc = jnp.zeros((pos.shape[0], F), jnp.float32)
        for c in range(8):
            off = offsets[c]
            grid = base + off[None, :]                               # (N,3)
            w = jnp.prod(jnp.where(off[None, :] == 1, frac, 1.0 - frac),
                         axis=-1, keepdims=True)                     # (N,1)
            if res ** 3 <= T:          # dense level
                g = jnp.clip(grid, 0, res - 1)
                idx = g[:, 0] + g[:, 1] * res + g[:, 2] * res * res
            else:                      # hashed level (tcnn spatial hash)
                g = grid.astype(jnp.uint32)
                idx = ((g[:, 0] * _PRIMES[0])
                       ^ (g[:, 1] * _PRIMES[1])
                       ^ (g[:, 2] * _PRIMES[2]))
                idx = (idx & jnp.uint32(T - 1)).astype(jnp.int32)
            acc = acc + tables[l][idx] * w
        enc_levels.append(acc)
    return jnp.concatenate(enc_levels, axis=-1)                      # (N,32)


# ----------------------------- pure-JAX reference ----------------------------
def reference_forward(pos_enc, viewdirs, params):
    bf16, f32 = jnp.bfloat16, jnp.float32
    w0d = params["w0d"].astype(bf16)
    w1d = params["w1d"].astype(bf16)
    w0c = params["w0c"].astype(bf16)
    w1c = params["w1c"].astype(bf16)
    w2c = params["w2c"].astype(bf16)
    h = jax.nn.relu(jnp.dot(pos_enc.astype(bf16), w0d, preferred_element_type=f32))
    feat = jax.nn.relu(jnp.dot(h.astype(bf16), w1d, preferred_element_type=f32))
    sigma = feat[:, :1]
    sh = sh4_encode(viewdirs)
    xcat = jnp.concatenate([feat, sh], axis=-1)
    hc = jax.nn.relu(jnp.dot(xcat.astype(bf16), w0c, preferred_element_type=f32))
    hc = jax.nn.relu(jnp.dot(hc.astype(bf16), w1c, preferred_element_type=f32))
    rgb = jax.nn.sigmoid(jnp.dot(hc.astype(bf16), w2c, preferred_element_type=f32))
    return rgb, sigma


# ----------------------------- main -------------------------------------------
if __name__ == "__main__":
    N = 2000                                   # rays/samples (exercises padding + 2-step grid)

    key = jax.random.PRNGKey(0)
    k_pos, k_dir, k_tab, k_mlp = jax.random.split(key, 4)

    # deterministic synthetic inputs; pos/viewdirs in [0,1] as tcnn expects
    pos = jax.random.uniform(k_pos, (N, 3), dtype=jnp.float32)
    viewdirs = jax.random.uniform(k_dir, (N, 3), dtype=jnp.float32)

    # hash-grid tables (one per level)
    scales, resolutions, sizes = level_params()
    tab_keys = jax.random.split(k_tab, L)
    tables = [jax.random.uniform(tab_keys[l], (sizes[l], F),
                                 minval=-0.1, maxval=0.1, dtype=jnp.float32)
              for l in range(L)]

    # MLP weights (tcnn FullyFusedMLP has no biases)
    def winit(k, fan_in, fan_out):
        return (jax.random.normal(k, (fan_in, fan_out), dtype=jnp.float32)
                * np.float32(np.sqrt(2.0 / fan_in)))

    wk = jax.random.split(k_mlp, 5)
    params = {
        "w0d": winit(wk[0], POS_ENC_DIM, HIDDEN),   # 32 -> 64
        "w1d": winit(wk[1], HIDDEN, FEAT_DIM),      # 64 -> 16
        "w0c": winit(wk[2], 32, HIDDEN),            # [feat(16), sh(16)] -> 64
        "w1c": winit(wk[3], HIDDEN, HIDDEN),        # 64 -> 64
        "w2c": winit(wk[4], HIDDEN, 3),             # 64 -> 3
    }

    # hash-grid gather + trilinear interpolation (plain JAX glue)
    pos_enc = hash_grid_encode(pos, tables, scales, resolutions)

    # Pallas kernel forward
    rgb, sigma = instant_ngp_pallas(pos_enc, viewdirs, params, tm=1024)
    jax.block_until_ready((rgb, sigma))

    # correctness check against pure-JAX reference (same bf16 weights/casts)
    rgb_ref, sigma_ref = reference_forward(pos_enc, viewdirs, params)
    assert rgb.shape == (N, 3) and sigma.shape == (N, 1)
    assert np.allclose(np.asarray(rgb), np.asarray(rgb_ref), rtol=1e-2, atol=1e-2)
    assert np.allclose(np.asarray(sigma), np.asarray(sigma_ref), rtol=1e-2, atol=1e-2)
    assert np.all(np.isfinite(np.asarray(rgb))) and np.all(np.isfinite(np.asarray(sigma)))

    print("KERNEL_OK")
</pallas_src>

<mosaic_0001>
module attributes {stable_mosaic.version = 11 : i64} {
  func.func @ngp_kernel(%arg0: i32, %arg1: memref<48x1024xbf16, #tpu.memory_space<vmem>>, %arg2: memref<64x32xbf16, #tpu.memory_space<vmem>>, %arg3: memref<16x64xbf16, #tpu.memory_space<vmem>>, %arg4: memref<64x32xbf16, #tpu.memory_space<vmem>>, %arg5: memref<64x64xbf16, #tpu.memory_space<vmem>>, %arg6: memref<4x64xbf16, #tpu.memory_space<vmem>>, %arg7: memref<4x1024xf32, #tpu.memory_space<vmem>>) attributes {dimension_semantics = [#tpu.dimension_semantics<parallel>], iteration_bounds = array<i64: 2>, scalar_prefetch = 0 : i64, scratch_operands = 0 : i64, tpu.core_type = #tpu.core_type<tc>, window_params = [{transform_indices = @transform_0, window_bounds = array<i64: 48, 1024>}, {pipeline_mode = #tpu.pipeline_mode<synchronous>, transform_indices = @transform_1, window_bounds = array<i64: 64, 32>}, {pipeline_mode = #tpu.pipeline_mode<synchronous>, transform_indices = @transform_2, window_bounds = array<i64: 16, 64>}, {pipeline_mode = #tpu.pipeline_mode<synchronous>, transform_indices = @transform_3, window_bounds = array<i64: 64, 32>}, {pipeline_mode = #tpu.pipeline_mode<synchronous>, transform_indices = @transform_4, window_bounds = array<i64: 64, 64>}, {pipeline_mode = #tpu.pipeline_mode<synchronous>, transform_indices = @transform_5, window_bounds = array<i64: 4, 64>}, {transform_indices = @transform_6, window_bounds = array<i64: 4, 1024>}]} {
    %c0 = arith.constant 0 : index
    %c0_0 = arith.constant 0 : index
    %0 = vector.load %arg1[%c0, %c0_0] : memref<48x1024xbf16, #tpu.memory_space<vmem>>, vector<48x1024xbf16>
    %1 = vector.extract_strided_slice %0 {offsets = [0, 0], sizes = [32, 1024], strides = [1, 1]} : vector<48x1024xbf16> to vector<32x1024xbf16>
    %2 = vector.extract_strided_slice %0 {offsets = [32, 0], sizes = [16, 1024], strides = [1, 1]} : vector<48x1024xbf16> to vector<16x1024xbf16>
    %c0_1 = arith.constant 0 : index
    %c0_2 = arith.constant 0 : index
    %3 = vector.load %arg2[%c0_1, %c0_2] : memref<64x32xbf16, #tpu.memory_space<vmem>>, vector<64x32xbf16>
    %cst = arith.constant dense<0.000000e+00> : vector<64x1024xf32>
    %4 = tpu.matmul %3, %1, %cst {dimension_numbers = #tpu.dot_dimension_numbers<[1], [0], [0], [1], [0, 0, 1, 1], [], []>} : vector<64x32xbf16>, vector<32x1024xbf16>, vector<64x1024xf32> -> vector<64x1024xf32>
    %cst_3 = arith.constant 0.000000e+00 : f32
    %5 = vector.broadcast %cst_3 : f32 to vector<64x1024xf32>
    %6 = arith.maximumf %4, %5 : vector<64x1024xf32>
    %c0_4 = arith.constant 0 : index
    %c0_5 = arith.constant 0 : index
    %7 = vector.load %arg3[%c0_4, %c0_5] : memref<16x64xbf16, #tpu.memory_space<vmem>>, vector<16x64xbf16>
    %8 = arith.truncf %6 : vector<64x1024xf32> to vector<64x1024xbf16>
    %cst_6 = arith.constant dense<0.000000e+00> : vector<16x1024xf32>
    %9 = tpu.matmul %7, %8, %cst_6 {dimension_numbers = #tpu.dot_dimension_numbers<[1], [0], [0], [1], [0, 0, 1, 1], [], []>} : vector<16x64xbf16>, vector<64x1024xbf16>, vector<16x1024xf32> -> vector<16x1024xf32>
    %cst_7 = arith.constant 0.000000e+00 : f32
    %10 = vector.broadcast %cst_7 : f32 to vector<16x1024xf32>
    %11 = arith.maximumf %9, %10 : vector<16x1024xf32>
    %12 = vector.extract_strided_slice %11 {offsets = [0, 0], sizes = [1, 1024], strides = [1, 1]} : vector<16x1024xf32> to vector<1x1024xf32>
    %13 = arith.truncf %11 : vector<16x1024xf32> to vector<16x1024xbf16>
    %14 = tpu.concatenate %13, %2 in 0 : vector<16x1024xbf16>, vector<16x1024xbf16> -> vector<32x1024xbf16>
    %c0_8 = arith.constant 0 : index
    %c0_9 = arith.constant 0 : index
    %15 = vector.load %arg4[%c0_8, %c0_9] : memref<64x32xbf16, #tpu.memory_space<vmem>>, vector<64x32xbf16>
    %cst_10 = arith.constant dense<0.000000e+00> : vector<64x1024xf32>
    %16 = tpu.matmul %15, %14, %cst_10 {dimension_numbers = #tpu.dot_dimension_numbers<[1], [0], [0], [1], [0, 0, 1, 1], [], []>} : vector<64x32xbf16>, vector<32x1024xbf16>, vector<64x1024xf32> -> vector<64x1024xf32>
    %cst_11 = arith.constant 0.000000e+00 : f32
    %17 = vector.broadcast %cst_11 : f32 to vector<64x1024xf32>
    %18 = arith.maximumf %16, %17 : vector<64x1024xf32>
    %c0_12 = arith.constant 0 : index
    %c0_13 = arith.constant 0 : index
    %19 = vector.load %arg5[%c0_12, %c0_13] : memref<64x64xbf16, #tpu.memory_space<vmem>>, vector<64x64xbf16>
    %20 = arith.truncf %18 : vector<64x1024xf32> to vector<64x1024xbf16>
    %cst_14 = arith.constant dense<0.000000e+00> : vector<64x1024xf32>
    %21 = tpu.matmul %19, %20, %cst_14 {dimension_numbers = #tpu.dot_dimension_numbers<[1], [0], [0], [1], [0, 0, 1, 1], [], []>} : vector<64x64xbf16>, vector<64x1024xbf16>, vector<64x1024xf32> -> vector<64x1024xf32>
    %cst_15 = arith.constant 0.000000e+00 : f32
    %22 = vector.broadcast %cst_15 : f32 to vector<64x1024xf32>
    %23 = arith.maximumf %21, %22 : vector<64x1024xf32>
    %c0_16 = arith.constant 0 : index
    %c0_17 = arith.constant 0 : index
    %24 = vector.load %arg6[%c0_16, %c0_17] : memref<4x64xbf16, #tpu.memory_space<vmem>>, vector<4x64xbf16>
    %25 = arith.truncf %23 : vector<64x1024xf32> to vector<64x1024xbf16>
    %cst_18 = arith.constant dense<0.000000e+00> : vector<4x1024xf32>
    %26 = tpu.matmul %24, %25, %cst_18 {dimension_numbers = #tpu.dot_dimension_numbers<[1], [0], [0], [1], [0, 0, 1, 1], [], []>} : vector<4x64xbf16>, vector<64x1024xbf16>, vector<4x1024xf32> -> vector<4x1024xf32>
    %27 = arith.negf %26 : vector<4x1024xf32>
    %28 = math.exp %27 : vector<4x1024xf32>
    %cst_19 = arith.constant 1.000000e+00 : f32
    %29 = vector.broadcast %cst_19 : f32 to vector<4x1024xf32>
    %30 = arith.addf %29, %28 : vector<4x1024xf32>
    %31 = arith.divf %29, %30 : vector<4x1024xf32>
    %32 = tpu.iota {dimensions = array<i32: 0>} : vector<4x1024xi32>
    %c3_i32 = arith.constant 3 : i32
    %33 = vector.broadcast %c3_i32 : i32 to vector<4x1024xi32>
    %34 = arith.cmpi eq, %32, %33 : vector<4x1024xi32>
    %35 = vector.shape_cast %12 : vector<1x1024xf32> to vector<1x1024xf32>
    %36 = vector.broadcast %35 : vector<1x1024xf32> to vector<4x1024xf32>
    %37 = arith.select %34, %36, %31 : vector<4x1024xi1>, vector<4x1024xf32>
    %c0_20 = arith.constant 0 : index
    %c0_21 = arith.constant 0 : index
    %38 = vector.load %arg7[%c0_20, %c0_21] : memref<4x1024xf32, #tpu.memory_space<vmem>>, vector<4x1024xf32>
    tpu.vector_store %arg7[%c0_20, %c0_21], %37 {strides = array<i32>} : memref<4x1024xf32, #tpu.memory_space<vmem>>, vector<4x1024xf32>,
    return
  }
  func.func @transform_0(%arg0: i32) -> (i32, i32) {
    %c0_i32 = arith.constant 0 : i32
    %c0_i32_0 = arith.constant 0 : i32
    return %c0_i32, %arg0 : i32, i32
  }
  func.func @transform_1(%arg0: i32) -> (i32, i32) {
    %c0_i32 = arith.constant 0 : i32
    %c0_i32_0 = arith.constant 0 : i32
    %c0_i32_1 = arith.constant 0 : i32
    return %c0_i32, %c0_i32_0 : i32, i32
  }
  func.func @transform_2(%arg0: i32) -> (i32, i32) {
    %c0_i32 = arith.constant 0 : i32
    %c0_i32_0 = arith.constant 0 : i32
    %c0_i32_1 = arith.constant 0 : i32
    return %c0_i32, %c0_i32_0 : i32, i32
  }
  func.func @transform_3(%arg0: i32) -> (i32, i32) {
    %c0_i32 = arith.constant 0 : i32
    %c0_i32_0 = arith.constant 0 : i32
    %c0_i32_1 = arith.constant 0 : i32
    return %c0_i32, %c0_i32_0 : i32, i32
  }
  func.func @transform_4(%arg0: i32) -> (i32, i32) {
    %c0_i32 = arith.constant 0 : i32
    %c0_i32_0 = arith.constant 0 : i32
    %c0_i32_1 = arith.constant 0 : i32
    return %c0_i32, %c0_i32_0 : i32, i32
  }
  func.func @transform_5(%arg0: i32) -> (i32, i32) {
    %c0_i32 = arith.constant 0 : i32
    %c0_i32_0 = arith.constant 0 : i32
    %c0_i32_1 = arith.constant 0 : i32
    return %c0_i32, %c0_i32_0 : i32, i32
  }
  func.func @transform_6(%arg0: i32) -> (i32, i32) {
    %c0_i32 = arith.constant 0 : i32
    %c0_i32_0 = arith.constant 0 : i32
    return %c0_i32, %arg0 : i32, i32
  }
}

</mosaic_0001>

<llo_original>
// kernel: tpu_custom_call.1
$region0: #{tpu_custom_call.1}
  #allocation0 [shape = 'u32[]', space=smem, size = 0x4, offset = 0x4, fixed_abs, tag = 'smem constant byte address 0x4 - core index']
  #allocation1 [shape = 'u32[144,128]{1,0:T(1,128)}', space=vmem, size = 0x12000, scoped, tag = 'internal scratch']
  %s0 = inlined_call_operand.hbm [shape: bf16[48,2048], index: 0, kind: input, shape index: {}]
  %s1 = inlined_call_operand.vmem [shape: bf16[64,32], index: 1, kind: input, shape index: {}]
  %s2 = inlined_call_operand.vmem [shape: bf16[16,64], index: 2, kind: input, shape index: {}]
  %s3 = inlined_call_operand.vmem [shape: bf16[64,32], index: 3, kind: input, shape index: {}]
  %s4 = inlined_call_operand.vmem [shape: bf16[64,64], index: 4, kind: input, shape index: {}]
  %s5 = inlined_call_operand.vmem [shape: bf16[4,64], index: 5, kind: input, shape index: {}]
  %s6 = inlined_call_operand.hbm [shape: f32[4,2048], index: 6, kind: output, shape index: {}]
  %s7 = sld [smem:[#allocation0]]
  $region61: #{tpu_custom_call.1} parent=0
    _
  %s9 = ssub.s32 1, %s7
  %s10 = scalar_select 0, %s9, %s7
  $region1: #{tpu_custom_call.1} parent=0
    #allocation2 [shape = 'u8[196608]{0}', space=vmem, size = 0x30000, scoped, tag = 'input window, operand 0']
    #allocation3 [shape = 's32[2]{0}', space=sflag, size = 0x8, scoped, tag = 'scoped memory for tpu_custom_call.1']
    #allocation4 [shape = 's32[2]{0}', space=sflag, size = 0x8, scoped, tag = 'scoped memory for tpu_custom_call.1']
    #allocation5 [shape = 'u8[32768]{0}', space=vmem, size = 0x8000, scoped, tag = 'output window, operand 0']
    %11 = vsyncpa [#allocation3], 0
    %s12 = scalar_lea.sflag [#allocation3], 1
    %13 = vsyncpa %s12, 0
    %14 = vsyncpa [#allocation4], 0
    %s15 = scalar_lea.sflag [#allocation4], 1
    %16 = vsyncpa %s15, 0
    loop: start=0, step=1, limit=4
    $region2: #{tpu_custom_call.1} parent=1 // loop_pre_header
      _
    $region3: #{tpu_custom_call.1} parent=1 // loop_header
      %s18 = sphi 0, %s22
      %p19 = scmp.ge.s32.totalorder %s18, 4
      %s28 = sphi 0, %s30
      %s31 = sphi 0, %s28
      %s32 = sphi 0, %s31
      %s48 = sphi 0, %s32
      %s52 = sphi 0, %s52
      %s54 = sphi 0, %s52
      %s55 = sphi 0, %s54
      %s69 = sphi 0, %s55
      %s73 = sphi 0, %s73
      %s75 = sphi 0, %s73
      %s76 = sphi 0, %s75
      %s90 = sphi 0, %s76
      %s94 = sphi 0, %s94
      %s96 = sphi 0, %s94
      %s97 = sphi 0, %s96
      %s111 = sphi 0, %s97
      %s115 = sphi 0, %s115
      %s117 = sphi 0, %s115
      %s118 = sphi 0, %s117
      %s132 = sphi 0, %s118
      %s136 = sphi 0, %s136
      %s138 = sphi 0, %s136
      %s139 = sphi 0, %s138
      %s153 = sphi 0, %s139
      %s159 = sphi 0, %s161
      %s162 = sphi 0, %s159
      %s163 = sphi 0, %s162
      %s179 = sphi 0, %s163
    $region4: #{tpu_custom_call.1} parent=1 // loop_header_branch
      %21 = sbr.rel (%p19) target = $region8
    $region5: #{tpu_custom_call.1} parent=1 // loop_body
      %s23 = ssub.s32 %s18, 1
      %s24 = ssub.s32 %s18, 2
      %s25 = sadd.s32 %s18, 1
      %s26 = ssub.s32 %s18, %s25
      %p27 = scmp.eq.s32.totalorder %s26, 0
      %s29 = sadd.s32 %s28, 1
      %s30 = scalar_select %p27, %s28, %s29
      %p33 = pneg %p27
      %p34 = scmp.eq.s32.totalorder %s18, 1
      %p35 = por %p33, %p34
      %p36 = scmp.ne.s32.totalorder %s28, %s31
      %p37 = scmp.eq.s32.totalorder %s18, 0
      %p38 = por %p36, %p37
      %p39 = scmp.ne.s32.totalorder %s28, %s31
      %p40 = scmp.eq.s32.totalorder %s23, 1
      %p41 = por %p39, %p40
      %p42 = scmp.ne.s32.totalorder %s31, %s32
      %p43 = scmp.eq.s32.totalorder %s23, 0
      %p44 = por %p42, %p43
      %p45 = scmp.ne.s32.totalorder %s31, %s32
      %p46 = scmp.eq.s32.totalorder %s24, 1
      %p47 = por %p45, %p46
      %p49 = scmp.ne.s32.totalorder %s32, %s48
      %p50 = scmp.eq.s32.totalorder %s24, 0
      %p51 = por %p49, %p50
      %s53 = sadd.s32 %s52, 1
      %p56 = scmp.eq.s32.totalorder %s18, 1
      %p57 = scmp.ne.s32.totalorder %s52, %s54
      %p58 = scmp.eq.s32.totalorder %s18, 0
      %p59 = por %p57, %p58
      %p60 = scmp.ne.s32.totalorder %s52, %s54
      %p61 = scmp.eq.s32.totalorder %s23, 1
      %p62 = por %p60, %p61
      %p63 = scmp.ne.s32.totalorder %s54, %s55
      %p64 = scmp.eq.s32.totalorder %s23, 0
      %p65 = por %p63, %p64
      %p66 = scmp.ne.s32.totalorder %s54, %s55
      %p67 = scmp.eq.s32.totalorder %s24, 1
      %p68 = por %p66, %p67
      %p70 = scmp.ne.s32.totalorder %s55, %s69
      %p71 = scmp.eq.s32.totalorder %s24, 0
      %p72 = por %p70, %p71
      %s74 = sadd.s32 %s73, 1
      %p77 = scmp.eq.s32.totalorder %s18, 1
      %p78 = scmp.ne.s32.totalorder %s73, %s75
      %p79 = scmp.eq.s32.totalorder %s18, 0
      %p80 = por %p78, %p79
      %p81 = scmp.ne.s32.totalorder %s73, %s75
      %p82 = scmp.eq.s32.totalorder %s23, 1
      %p83 = por %p81, %p82
      %p84 = scmp.ne.s32.totalorder %s75, %s76
      %p85 = scmp.eq.s32.totalorder %s23, 0
      %p86 = por %p84, %p85
      %p87 = scmp.ne.s32.totalorder %s75, %s76
      %p88 = scmp.eq.s32.totalorder %s24, 1
      %p89 = por %p87, %p88
      %p91 = scmp.ne.s32.totalorder %s76, %s90
      %p92 = scmp.eq.s32.totalorder %s24, 0
      %p93 = por %p91, %p92
      %s95 = sadd.s32 %s94, 1
      %p98 = scmp.eq.s32.totalorder %s18, 1
      %p99 = scmp.ne.s32.totalorder %s94, %s96
      %p100 = scmp.eq.s32.totalorder %s18, 0
      %p101 = por %p99, %p100
      %p102 = scmp.ne.s32.totalorder %s94, %s96
      %p103 = scmp.eq.s32.totalorder %s23, 1
      %p104 = por %p102, %p103
      %p105 = scmp.ne.s32.totalorder %s96, %s97
      %p106 = scmp.eq.s32.totalorder %s23, 0
      %p107 = por %p105, %p106
      %p108 = scmp.ne.s32.totalorder %s96, %s97
      %p109 = scmp.eq.s32.totalorder %s24, 1
      %p110 = por %p108, %p109
      %p112 = scmp.ne.s32.totalorder %s97, %s111
      %p113 = scmp.eq.s32.totalorder %s24, 0
      %p114 = por %p112, %p113
      %s116 = sadd.s32 %s115, 1
      %p119 = scmp.eq.s32.totalorder %s18, 1
      %p120 = scmp.ne.s32.totalorder %s115, %s117
      %p121 = scmp.eq.s32.totalorder %s18, 0
      %p122 = por %p120, %p121
      %p123 = scmp.ne.s32.totalorder %s115, %s117
      %p124 = scmp.eq.s32.totalorder %s23, 1
      %p125 = por %p123, %p124
      %p126 = scmp.ne.s32.totalorder %s117, %s118
      %p127 = scmp.eq.s32.totalorder %s23, 0
      %p128 = por %p126, %p127
      %p129 = scmp.ne.s32.totalorder %s117, %s118
      %p130 = scmp.eq.s32.totalorder %s24, 1
      %p131 = por %p129, %p130
      %p133 = scmp.ne.s32.totalorder %s118, %s132
      %p134 = scmp.eq.s32.totalorder %s24, 0
      %p135 = por %p133, %p134
      %s137 = sadd.s32 %s136, 1
      %p140 = scmp.eq.s32.totalorder %s18, 1
      %p141 = scmp.ne.s32.totalorder %s136, %s138
      %p142 = scmp.eq.s32.totalorder %s18, 0
      %p143 = por %p141, %p142
      %p144 = scmp.ne.s32.totalorder %s136, %s138
      %p145 = scmp.eq.s32.totalorder %s23, 1
      %p146 = por %p144, %p145
      %p147 = scmp.ne.s32.totalorder %s138, %s139
      %p148 = scmp.eq.s32.totalorder %s23, 0
      %p149 = por %p147, %p148
      %p150 = scmp.ne.s32.totalorder %s138, %s139
      %p151 = scmp.eq.s32.totalorder %s24, 1
      %p152 = por %p150, %p151
      %p154 = scmp.ne.s32.totalorder %s139, %s153
      %p155 = scmp.eq.s32.totalorder %s24, 0
      %p156 = por %p154, %p155
      %s157 = ssub.s32 %s18, %s25
      %p158 = scmp.eq.s32.totalorder %s157, 0
      %s160 = sadd.s32 %s159, 1
      %s161 = scalar_select %p158, %s159, %s160
      %p164 = pneg %p158
      %p165 = scmp.eq.s32.totalorder %s18, 1
      %p166 = por %p164, %p165
      %p167 = scmp.ne.s32.totalorder %s159, %s162
      %p168 = scmp.eq.s32.totalorder %s18, 0
      %p169 = por %p167, %p168
      %p170 = scmp.ne.s32.totalorder %s159, %s162
      %p171 = scmp.eq.s32.totalorder %s23, 1
      %p172 = por %p170, %p171
      %p173 = scmp.ne.s32.totalorder %s162, %s163
      %p174 = scmp.eq.s32.totalorder %s23, 0
      %p175 = por %p173, %p174
      %p176 = scmp.ne.s32.totalorder %s162, %s163
      %p177 = scmp.eq.s32.totalorder %s24, 1
      %p178 = por %p176, %p177
      %p180 = scmp.ne.s32.totalorder %s163, %s179
      %p181 = scmp.eq.s32.totalorder %s24, 0
      %p182 = por %p180, %p181
      %p183 = scmp.le.s32.totalorder 1, %s18
      %p184 = scmp.lt.s32.totalorder %s18, 3
      %p185 = pnand %p183, %p184
      %p186 = pneg %p185
      // Predicated region
      $region9: #{tpu_custom_call.1} parent=5 // pred_check
        _
      $region10: #{tpu_custom_call.1} parent=5 // pred_check_branch
        %188 = sbr.rel (%p185) target = $region12
      $region11: #{tpu_custom_call.1} parent=5 // pred_region
        %s189 = ssub.s32 %s18, 1
        // Predicated region
        $region13: #{tpu_custom_call.1} parent=11 // pred_check
          %p190 = pneg %p65
        $region14: #{tpu_custom_call.1} parent=11 // pred_check_branch
          %192 = sbr.rel (%p190) target = $region16
        $region15: #{tpu_custom_call.1} parent=11 // pred_region
          _
        $region16: #{tpu_custom_call.1} parent=11 // pred_fallthru
          _
        // Predicated region
        $region17: #{tpu_custom_call.1} parent=11 // pred_check
          %p193 = pneg %p86
        $region18: #{tpu_custom_call.1} parent=11 // pred_check_branch
          %195 = sbr.rel (%p193) target = $region20
        $region19: #{tpu_custom_call.1} parent=11 // pred_region
          _
        $region20: #{tpu_custom_call.1} parent=11 // pred_fallthru
          _
        // Predicated region
        $region21: #{tpu_custom_call.1} parent=11 // pred_check
          %p196 = pneg %p107
        $region22: #{tpu_custom_call.1} parent=11 // pred_check_branch
          %198 = sbr.rel (%p196) target = $region24
        $region23: #{tpu_custom_call.1} parent=11 // pred_region
          _
        $region24: #{tpu_custom_call.1} parent=11 // pred_fallthru
          _
        // Predicated region
        $region25: #{tpu_custom_call.1} parent=11 // pred_check
          %p199 = pneg %p128
        $region26: #{tpu_custom_call.1} parent=11 // pred_check_branch
          %201 = sbr.rel (%p199) target = $region28
        $region27: #{tpu_custom_call.1} parent=11 // pred_region
          _
        $region28: #{tpu_custom_call.1} parent=11 // pred_fallthru
          _
        // Predicated region
        $region29: #{tpu_custom_call.1} parent=11 // pred_check
          %p202 = pneg %p149
        $region30: #{tpu_custom_call.1} parent=11 // pred_check_branch
          %204 = sbr.rel (%p202) target = $region32
        $region31: #{tpu_custom_call.1} parent=11 // pred_region
          _
        $region32: #{tpu_custom_call.1} parent=11 // pred_fallthru
          _
      $region12: #{tpu_custom_call.1} parent=5 // pred_fallthru
        _
      %p205 = scmp.lt.s32.totalorder %s18, 2
      // Predicated region
      $region33: #{tpu_custom_call.1} parent=5 // pred_check
        %p206 = pneg %p205
      $region34: #{tpu_custom_call.1} parent=5 // pred_check_branch
        %208 = sbr.rel (%p206) target = $region36
      $region35: #{tpu_custom_call.1} parent=5 // pred_region
        // Predicated region
        $region37: #{tpu_custom_call.1} parent=35 // pred_check
          %p209 = pneg %p38
        $region38: #{tpu_custom_call.1} parent=35 // pred_check_branch
          %211 = sbr.rel (%p209) target = $region40
        $region39: #{tpu_custom_call.1} parent=35 // pred_region
          %s212 = sand.u32 %s28, 1
          %s213 = scalar_lea.sflag [#allocation3], %s212
          %s214 = sand.u32 %s28, 1
          %s215 = smul.addr %s214, 192
          %s216 = scalar_lea.vmem [#allocation2], %s215
          %s217 = smul.u32 8, %s18
          %s219 = ssub.s32 3072, 3072
          %220 = vsyncadd %s213, %s219
          %s221 = smul.addr %s217, 64
          %s222 = scalar_lea.hbm %s0, %s221
          %s223 = sshll.u32 %s216, 4
          %s224 = int_to_ptr.vmem [resolvable:$true] %s223
          %229 = dma.hbm_to_vmem [thread:$0]  %s222, 3072, %s224, %s213, 1024, 512, 32
        $region40: #{tpu_custom_call.1} parent=35 // pred_fallthru
          _
      $region36: #{tpu_custom_call.1} parent=5 // pred_fallthru
        _
      %p230 = scmp.le.s32.totalorder 1, %s18
      %p231 = scmp.lt.s32.totalorder %s18, 3
      %p232 = pnand %p230, %p231
      %p233 = pneg %p232
      // Predicated region
      $region41: #{tpu_custom_call.1} parent=5 // pred_check
        _
      $region42: #{tpu_custom_call.1} parent=5 // pred_check_branch
        %235 = sbr.rel (%p232) target = $region44
      $region43: #{tpu_custom_call.1} parent=5 // pred_region
        %s236 = ssub.s32 %s18, 1
        %s237 = sand.u32 %s31, 1
        %s238 = scalar_lea.sflag [#allocation3], %s237
        %s239 = sand.u32 %s31, 1
        %s240 = smul.addr %s239, 192
        %s241 = scalar_lea.vmem [#allocation2], %s240
        // Predicated region
        $region45: #{tpu_custom_call.1} parent=43 // pred_check
          %p242 = pneg %p44
        $region46: #{tpu_custom_call.1} parent=43 // pred_check_branch
          %244 = sbr.rel (%p242) target = $region48
        $region47: #{tpu_custom_call.1} parent=43 // pred_region
          %245 = dma.done %s238, 3072
        $region48: #{tpu_custom_call.1} parent=43 // pred_fallthru
          _
        %s246 = sand.u32 %s31, 1
        %s247 = scalar_lea.sflag [#allocation3], %s246
        %s248 = sand.u32 %s31, 1
        %s249 = smul.addr %s248, 192
        %s250 = scalar_lea.vmem [#allocation2], %s249
        %p251 = pneg %p44
        %p252 = pneg %p41
        %p253 = pneg %p65
        %p254 = pneg %p62
        %p255 = pneg %p86
        %p256 = pneg %p83
        %p257 = pneg %p107
        %p258 = pneg %p104
        %p259 = pneg %p128
        %p260 = pneg %p125
        %p261 = pneg %p149
        %p262 = pneg %p146
        %p263 = pneg %p175
        %p264 = pneg %p172
        %s265 = sand.u32 %s162, 1
        %s266 = scalar_lea.sflag [#allocation4], %s265
        %s267 = sand.u32 %s162, 1
        %s268 = smul.addr %s267, 32
        %s269 = scalar_lea.vmem [#allocation5], %s268
        %s270 = smul.u32 8, %s23
        %s271 = smul.u32 8, %s23
        %v273 = vld [vmem:[%s241] sm:$0xff]
        %v274 = vld [vmem:[%s241 + $0x8] sm:$0xff]
        %v275 = vld [vmem:[%s241 + $0x10] sm:$0xff]
        %v276 = vld [vmem:[%s241 + $0x18] sm:$0xff]
        %v277 = vld [vmem:[%s241 + $0x20] sm:$0xff]
        %v278 = vld [vmem:[%s241 + $0x28] sm:$0xff]
        %v279 = vld [vmem:[%s241 + $0x30] sm:$0xff]
        %v280 = vld [vmem:[%s241 + $0x38] sm:$0xff]
        %v281 = vld [vmem:[%s241 + $0x40] sm:$0xff]
        %v282 = vld [vmem:[%s241 + $0x48] sm:$0xff]
        %v283 = vld [vmem:[%s241 + $0x50] sm:$0xff]
        %v284 = vld [vmem:[%s241 + $0x58] sm:$0xff]
        %v285 = vld [vmem:[%s241 + $0x60] sm:$0xff]
        %v286 = vld [vmem:[%s241 + $0x68] sm:$0xff]
        %v287 = vld [vmem:[%s241 + $0x70] sm:$0xff]
        %v288 = vld [vmem:[%s241 + $0x78] sm:$0xff]
        %v289 = vld [vmem:[%s241 + $0x80] sm:$0xff]
        %v290 = vld [vmem:[%s241 + $0x88] sm:$0xff]
        %v291 = vld [vmem:[%s241 + $0x90] sm:$0xff]
        %v292 = vld [vmem:[%s241 + $0x98] sm:$0xff]
        %v293 = vld [vmem:[%s241 + $0xa0] sm:$0xff]
        %v294 = vld [vmem:[%s241 + $0xa8] sm:$0xff]
        %v295 = vld [vmem:[%s241 + $0xb0] sm:$0xff]
        %v296 = vld [vmem:[%s241 + $0xb8] sm:$0xff]
        %v297 = vld [vmem:[%s1] sm:$0xf]
        %v298 = vld [vmem:[%s1 + $0x4] sm:$0xf]
        %v299 = vld [vmem:[%s1 + $0x8] sm:$0xf]
        %v300 = vld [vmem:[%s1 + $0xc] sm:$0xf]
        %v301 = vld [vmem:[%s1 + $0x10] sm:$0xf]
        %v302 = vld [vmem:[%s1 + $0x14] sm:$0xf]
        %v303 = vld [vmem:[%s1 + $0x18] sm:$0xf]
        %v304 = vld [vmem:[%s1 + $0x1c] sm:$0xf]
        %v313 = vunpack.c.l.b16 %v297
        %v314 = vunpack.c.l.b16 %v298
        %v315 = vunpack.c.l.b16 %v299
        %v316 = vunpack.c.l.b16 %v300
        %v317 = vunpack.c.l.b16 %v301
        %v318 = vunpack.c.l.b16 %v302
        %v319 = vunpack.c.l.b16 %v303
        %v320 = vunpack.c.l.b16 %v304
        %v321 = vpack.c.b16 %v314, %v313
        %v322 = vpack.c.b16 %v316, %v315
        %v323 = vpack.c.b16 %v318, %v317
        %v324 = vpack.c.b16 %v320, %v319
        %v341 = vunpack.c.l.b16 %v273
        %v342 = vunpack.c.h.b16 %v273
        %v343 = vunpack.c.l.b16 %v274
        %v344 = vunpack.c.h.b16 %v274
        %v345 = vunpack.c.l.b16 %v275
        %v346 = vunpack.c.h.b16 %v275
        %v347 = vunpack.c.l.b16 %v276
        %v348 = vunpack.c.h.b16 %v276
        %v349 = vunpack.c.l.b16 %v277
        %v350 = vunpack.c.h.b16 %v277
        %v351 = vunpack.c.l.b16 %v278
        %v352 = vunpack.c.h.b16 %v278
        %v353 = vunpack.c.l.b16 %v279
        %v354 = vunpack.c.h.b16 %v279
        %v355 = vunpack.c.l.b16 %v280
        %v356 = vunpack.c.h.b16 %v280
        %v357 = vunpack.c.l.b16 %v281
        %v358 = vunpack.c.h.b16 %v281
        %v359 = vunpack.c.l.b16 %v282
        %v360 = vunpack.c.h.b16 %v282
        %v361 = vunpack.c.l.b16 %v283
        %v362 = vunpack.c.h.b16 %v283
        %v363 = vunpack.c.l.b16 %v284
        %v364 = vunpack.c.h.b16 %v284
        %v365 = vunpack.c.l.b16 %v285
        %v366 = vunpack.c.h.b16 %v285
        %v367 = vunpack.c.l.b16 %v286
        %v368 = vunpack.c.h.b16 %v286
        %v369 = vunpack.c.l.b16 %v287
        %v370 = vunpack.c.h.b16 %v287
        %v371 = vunpack.c.l.b16 %v288
        %v372 = vunpack.c.h.b16 %v288
        %v373 = vpack.c.b16 %v349, %v341
        %v374 = vpack.c.b16 %v350, %v342
        %v375 = vpack.c.b16 %v351, %v343
        %v376 = vpack.c.b16 %v352, %v344
        %v377 = vpack.c.b16 %v353, %v345
        %v378 = vpack.c.b16 %v354, %v346
        %v379 = vpack.c.b16 %v355, %v347
        %v380 = vpack.c.b16 %v356, %v348
        %v381 = vpack.c.b16 %v365, %v357
        %v382 = vpack.c.b16 %v366, %v358
        %v383 = vpack.c.b16 %v367, %v359
        %v384 = vpack.c.b16 %v368, %v360
        %v385 = vpack.c.b16 %v369, %v361
        %v386 = vpack.c.b16 %v370, %v362
        %v387 = vpack.c.b16 %v371, %v363
        %v388 = vpack.c.b16 %v372, %v364
        %vm405 = vcmask 261120
        %v407 = vsel %vm405, %v321, 0
        %v410 = vsel %vm405, %v322, 0
        %v413 = vsel %vm405, %v323, 0
        %v416 = vsel %vm405, %v324, 0
        %418 = vmatprep.subr.bf16.mxu0 %v374
        %419 = vmatpush1.bf16.msra.mxu0 %v373
        %420 = vmatprep.subr.bf16.mxu0 %v382
        %421 = vmatpush1.bf16.msra.mxu0 %v381
        %422 = vmatprep.subr.bf16.mxu0 0
        %423 = vmatpush1.bf16.msra.mxu0 0
        %424 = vmatprep.subr.bf16.mxu0 0
        %425 = vmatpush1.bf16.msra.mxu0 0
        %426 = vmatprep.subr.bf16.mxu0 0
        %427 = vmatpush1.bf16.msra.mxu0 0
        %428 = vmatprep.subr.bf16.mxu0 0
        %429 = vmatpush1.bf16.msra.mxu0 0
        %430 = vmatprep.subr.bf16.mxu0 0
        %431 = vmatpush1.bf16.msra.mxu0 0
        %432 = vmatprep.subr.bf16.mxu0 0
        %433 = vmatpush1.bf16.msra.mxu0 0
        %434 = vmatprep.subr.bf16.mxu0 0
        %435 = vmatpush1.bf16.msra.mxu0 0
        %436 = vmatprep.subr.bf16.mxu0 0
        %437 = vmatpush1.bf16.msra.mxu0 0
        %438 = vmatprep.subr.bf16.mxu0 0
        %439 = vmatpush1.bf16.msra.mxu0 0
        %440 = vmatprep.subr.bf16.mxu0 0
        %441 = vmatpush1.bf16.msra.mxu0 0
        %442 = vmatprep.subr.bf16.mxu0 0
        %443 = vmatpush1.bf16.msra.mxu0 0
        %444 = vmatprep.subr.bf16.mxu0 0
        %445 = vmatpush1.bf16.msra.mxu0 0
        %446 = vmatprep.subr.bf16.mxu0 0
        %447 = vmatpush1.bf16.msra.mxu0 0
        %448 = vmatprep.subr.bf16.mxu0 0
        %449 = vmatpush1.bf16.msra.mxu0 0
        %450 = vmatprep.mubr.bf16.mxu0 0
        %451 = vmatmul.mubr.bf16.gmra.mrb[0].mxu0 %v407
        %v452 = vpop.f32.mrb[0].mxu0
        %v453 = vadd.f32 0.0, %v452
        %v454 = vpop.f32.mrb[0].mxu0
        %v455 = vadd.f32 0.0, %v454
        %v456 = vpop.f32.mrb[0].mxu0
        %v457 = vadd.f32 0.0, %v456
        %v458 = vpop.f32.mrb[0].mxu0
        %v459 = vadd.f32 0.0, %v458
        %460 = vmatprep.mubr.bf16.mxu0 0
        %461 = vmatmul.mubr.bf16.gmra.mrb[0].mxu0 %v410
        %v462 = vpop.f32.mrb[0].mxu0
        %v463 = vadd.f32 0.0, %v462
        %v464 = vpop.f32.mrb[0].mxu0
        %v465 = vadd.f32 0.0, %v464
        %v466 = vpop.f32.mrb[0].mxu0
        %v467 = vadd.f32 0.0, %v466
        %v468 = vpop.f32.mrb[0].mxu0
        %v469 = vadd.f32 0.0, %v468
        %470 = vmatprep.mubr.bf16.mxu0 0
        %471 = vmatmul.mubr.bf16.gmra.mrb[0].mxu0 %v413
        %v472 = vpop.f32.mrb[0].mxu0
        %v473 = vadd.f32 0.0, %v472
        %v474 = vpop.f32.mrb[0].mxu0
        %v475 = vadd.f32 0.0, %v474
        %v476 = vpop.f32.mrb[0].mxu0
        %v477 = vadd.f32 0.0, %v476
        %v478 = vpop.f32.mrb[0].mxu0
        %v479 = vadd.f32 0.0, %v478
        %480 = vmatprep.mubr.bf16.mxu0 0
        %481 = vmatmul.mubr.bf16.gmra.mrb[0].mxu0 %v416
        %v482 = vpop.f32.mrb[0].mxu0
        %v483 = vadd.f32 0.0, %v482
        %v484 = vpop.f32.mrb[0].mxu0
        %v485 = vadd.f32 0.0, %v484
        %v486 = vpop.f32.mrb[0].mxu0
        %v487 = vadd.f32 0.0, %v486
        %v488 = vpop.f32.mrb[0].mxu0
        %v489 = vadd.f32 0.0, %v488
        %490 = vdwg.mxu0
        %491 = vmatprep.subr.bf16.mxu0 %v376
        %492 = vmatpush1.bf16.msra.mxu0 %v375
        %493 = vmatprep.subr.bf16.mxu0 %v384
        %494 = vmatpush1.bf16.msra.mxu0 %v383
        %495 = vmatprep.subr.bf16.mxu0 0
        %496 = vmatpush1.bf16.msra.mxu0 0
        %497 = vmatprep.subr.bf16.mxu0 0
        %498 = vmatpush1.bf16.msra.mxu0 0
        %499 = vmatprep.subr.bf16.mxu0 0
        %500 = vmatpush1.bf16.msra.mxu0 0
        %501 = vmatprep.subr.bf16.mxu0 0
        %502 = vmatpush1.bf16.msra.mxu0 0
        %503 = vmatprep.subr.bf16.mxu0 0
        %504 = vmatpush1.bf16.msra.mxu0 0
        %505 = vmatprep.subr.bf16.mxu0 0
        %506 = vmatpush1.bf16.msra.mxu0 0
        %507 = vmatprep.subr.bf16.mxu0 0
        %508 = vmatpush1.bf16.msra.mxu0 0
        %509 = vmatprep.subr.bf16.mxu0 0
        %510 = vmatpush1.bf16.msra.mxu0 0
        %511 = vmatprep.subr.bf16.mxu0 0
        %512 = vmatpush1.bf16.msra.mxu0 0
        %513 = vmatprep.subr.bf16.mxu0 0
        %514 = vmatpush1.bf16.msra.mxu0 0
        %515 = vmatprep.subr.bf16.mxu0 0
        %516 = vmatpush1.bf16.msra.mxu0 0
        %517 = vmatprep.subr.bf16.mxu0 0
        %518 = vmatpush1.bf16.msra.mxu0 0
        %519 = vmatprep.subr.bf16.mxu0 0
        %520 = vmatpush1.bf16.msra.mxu0 0
        %521 = vmatprep.subr.bf16.mxu0 0
        %522 = vmatpush1.bf16.msra.mxu0 0
        %523 = vmatprep.mubr.bf16.mxu0 0
        %524 = vmatmul.mubr.bf16.gmra.mrb[0].mxu0 %v407
        %v525 = vpop.f32.mrb[0].mxu0
        %v526 = vadd.f32 0.0, %v525
        %v527 = vpop.f32.mrb[0].mxu0
        %v528 = vadd.f32 0.0, %v527
        %v529 = vpop.f32.mrb[0].mxu0
        %v530 = vadd.f32 0.0, %v529
        %v531 = vpop.f32.mrb[0].mxu0
        %v532 = vadd.f32 0.0, %v531
        %533 = vmatprep.mubr.bf16.mxu0 0
        %534 = vmatmul.mubr.bf16.gmra.mrb[0].mxu0 %v410
        %v535 = vpop.f32.mrb[0].mxu0
        %v536 = vadd.f32 0.0, %v535
        %v537 = vpop.f32.mrb[0].mxu0
        %v538 = vadd.f32 0.0, %v537
        %v539 = vpop.f32.mrb[0].mxu0
        %v540 = vadd.f32 0.0, %v539
        %v541 = vpop.f32.mrb[0].mxu0
        %v542 = vadd.f32 0.0, %v541
        %543 = vmatprep.mubr.bf16.mxu0 0
        %544 = vmatmul.mubr.bf16.gmra.mrb[0].mxu0 %v413
        %v545 = vpop.f32.mrb[0].mxu0
        %v546 = vadd.f32 0.0, %v545
        %v547 = vpop.f32.mrb[0].mxu0
        %v548 = vadd.f32 0.0, %v547
        %v549 = vpop.f32.mrb[0].mxu0
        %v550 = vadd.f32 0.0, %v549
        %v551 = vpop.f32.mrb[0].mxu0
        %v552 = vadd.f32 0.0, %v551
        %553 = vmatprep.mubr.bf16.mxu0 0
        %554 = vmatmul.mubr.bf16.gmra.mrb[0].mxu0 %v416
        %v555 = vpop.f32.mrb[0].mxu0
        %v556 = vadd.f32 0.0, %v555
        %v557 = vpop.f32.mrb[0].mxu0
        %v558 = vadd.f32 0.0, %v557
        %v559 = vpop.f32.mrb[0].mxu0
        %v560 = vadd.f32 0.0, %v559
        %v561 = vpop.f32.mrb[0].mxu0
        %v562 = vadd.f32 0.0, %v561
        %563 = vdwg.mxu0
        %564 = vmatprep.subr.bf16.mxu0 %v378
        %565 = vmatpush1.bf16.msra.mxu0 %v377
        %566 = vmatprep.subr.bf16.mxu0 %v386
        %567 = vmatpush1.bf16.msra.mxu0 %v385
        %568 = vmatprep.subr.bf16.mxu0 0
        %569 = vmatpush1.bf16.msra.mxu0 0
        %570 = vmatprep.subr.bf16.mxu0 0
        %571 = vmatpush1.bf16.msra.mxu0 0
        %572 = vmatprep.subr.bf16.mxu0 0
        %573 = vmatpush1.bf16.msra.mxu0 0
        %574 = vmatprep.subr.bf16.mxu0 0
        %575 = vmatpush1.bf16.msra.mxu0 0
        %576 = vmatprep.subr.bf16.mxu0 0
        %577 = vmatpush1.bf16.msra.mxu0 0
        %578 = vmatprep.subr.bf16.mxu0 0
        %579 = vmatpush1.bf16.msra.mxu0 0
        %580 = vmatprep.subr.bf16.mxu0 0
        %581 = vmatpush1.bf16.msra.mxu0 0
        %582 = vmatprep.subr.bf16.mxu0 0
        %583 = vmatpush1.bf16.msra.mxu0 0
        %584 = vmatprep.subr.bf16.mxu0 0
        %585 = vmatpush1.bf16.msra.mxu0 0
        %586 = vmatprep.subr.bf16.mxu0 0
        %587 = vmatpush1.bf16.msra.mxu0 0
        %588 = vmatprep.subr.bf16.mxu0 0
        %589 = vmatpush1.bf16.msra.mxu0 0
        %590 = vmatprep.subr.bf16.mxu0 0
        %591 = vmatpush1.bf16.msra.mxu0 0
        %592 = vmatprep.subr.bf16.mxu0 0
        %593 = vmatpush1.bf16.msra.mxu0 0
        %594 = vmatprep.subr.bf16.mxu0 0
        %595 = vmatpush1.bf16.msra.mxu0 0
        %596 = vmatprep.mubr.bf16.mxu0 0
        %597 = vmatmul.mubr.bf16.gmra.mrb[0].mxu0 %v407
        %v598 = vpop.f32.mrb[0].mxu0
        %v599 = vadd.f32 0.0, %v598
        %v600 = vpop.f32.mrb[0].mxu0
        %v601 = vadd.f32 0.0, %v600
        %v602 = vpop.f32.mrb[0].mxu0
        %v603 = vadd.f32 0.0, %v602
        %v604 = vpop.f32.mrb[0].mxu0
        %v605 = vadd.f32 0.0, %v604
        %606 = vmatprep.mubr.bf16.mxu0 0
        %607 = vmatmul.mubr.bf16.gmra.mrb[0].mxu0 %v410
        %v608 = vpop.f32.mrb[0].mxu0
        %v609 = vadd.f32 0.0, %v608
        %v610 = vpop.f32.mrb[0].mxu0
        %v611 = vadd.f32 0.0, %v610
        %v612 = vpop.f32.mrb[0].mxu0
        %v613 = vadd.f32 0.0, %v612
        %v614 = vpop.f32.mrb[0].mxu0
        %v615 = vadd.f32 0.0, %v614
        %616 = vmatprep.mubr.bf16.mxu0 0
        %617 = vmatmul.mubr.bf16.gmra.mrb[0].mxu0 %v413
        %v618 = vpop.f32.mrb[0].mxu0
        %v619 = vadd.f32 0.0, %v618
        %v620 = vpop.f32.mrb[0].mxu0
        %v621 = vadd.f32 0.0, %v620
        %v622 = vpop.f32.mrb[0].mxu0
        %v623 = vadd.f32 0.0, %v622
        %v624 = vpop.f32.mrb[0].mxu0
        %v625 = vadd.f32 0.0, %v624
        %626 = vmatprep.mubr.bf16.mxu0 0
        %627 = vmatmul.mubr.bf16.gmra.mrb[0].mxu0 %v416
        %v628 = vpop.f32.mrb[0].mxu0
        %v629 = vadd.f32 0.0, %v628
        %v630 = vpop.f32.mrb[0].mxu0
        %v631 = vadd.f32 0.0, %v630
        %v632 = vpop.f32.mrb[0].mxu0
        %v633 = vadd.f32 0.0, %v632
        %v634 = vpop.f32.mrb[0].mxu0
        %v635 = vadd.f32 0.0, %v634
        %636 = vdwg.mxu0
        %637 = vmatprep.subr.bf16.mxu0 %v380
        %638 = vmatpush1.bf16.msra.mxu0 %v379
        %639 = vmatprep.subr.bf16.mxu0 %v388
        %640 = vmatpush1.bf16.msra.mxu0 %v387
        %641 = vmatprep.subr.bf16.mxu0 0
        %642 = vmatpush1.bf16.msra.mxu0 0
        %643 = vmatprep.subr.bf16.mxu0 0
        %644 = vmatpush1.bf16.msra.mxu0 0
        %645 = vmatprep.subr.bf16.mxu0 0
        %646 = vmatpush1.bf16.msra.mxu0 0
        %647 = vmatprep.subr.bf16.mxu0 0
        %648 = vmatpush1.bf16.msra.mxu0 0
        %649 = vmatprep.subr.bf16.mxu0 0
        %650 = vmatpush1.bf16.msra.mxu0 0
        %651 = vmatprep.subr.bf16.mxu0 0
        %652 = vmatpush1.bf16.msra.mxu0 0
        %653 = vmatprep.subr.bf16.mxu0 0
        %654 = vmatpush1.bf16.msra.mxu0 0
        %655 = vmatprep.subr.bf16.mxu0 0
        %656 = vmatpush1.bf16.msra.mxu0 0
        %657 = vmatprep.subr.bf16.mxu0 0
        %658 = vmatpush1.bf16.msra.mxu0 0
        %659 = vmatprep.subr.bf16.mxu0 0
        %660 = vmatpush1.bf16.msra.mxu0 0
        %661 = vmatprep.subr.bf16.mxu0 0
        %662 = vmatpush1.bf16.msra.mxu0 0
        %663 = vmatprep.subr.bf16.mxu0 0
        %664 = vmatpush1.bf16.msra.mxu0 0
        %665 = vmatprep.subr.bf16.mxu0 0
        %666 = vmatpush1.bf16.msra.mxu0 0
        %667 = vmatprep.subr.bf16.mxu0 0
        %668 = vmatpush1.bf16.msra.mxu0 0
        %669 = vmatprep.mubr.bf16.mxu0 0
        %670 = vmatmul.mubr.bf16.gmra.mrb[0].mxu0 %v407
        %v671 = vpop.f32.mrb[0].mxu0
        %v672 = vadd.f32 0.0, %v671
        %v673 = vpop.f32.mrb[0].mxu0
        %v674 = vadd.f32 0.0, %v673
        %v675 = vpop.f32.mrb[0].mxu0
        %v676 = vadd.f32 0.0, %v675
        %v677 = vpop.f32.mrb[0].mxu0
        %v678 = vadd.f32 0.0, %v677
        %679 = vmatprep.mubr.bf16.mxu0 0
        %680 = vmatmul.mubr.bf16.gmra.mrb[0].mxu0 %v410
        %v681 = vpop.f32.mrb[0].mxu0
        %v682 = vadd.f32 0.0, %v681
        %v683 = vpop.f32.mrb[0].mxu0
        %v684 = vadd.f32 0.0, %v683
        %v685 = vpop.f32.mrb[0].mxu0
        %v686 = vadd.f32 0.0, %v685
        %v687 = vpop.f32.mrb[0].mxu0
        %v688 = vadd.f32 0.0, %v687
        %689 = vmatprep.mubr.bf16.mxu0 0
        %690 = vmatmul.mubr.bf16.gmra.mrb[0].mxu0 %v413
        %v691 = vpop.f32.mrb[0].mxu0
        %v692 = vadd.f32 0.0, %v691
        %v693 = vpop.f32.mrb[0].mxu0
        %v694 = vadd.f32 0.0, %v693
        %v695 = vpop.f32.mrb[0].mxu0
        %v696 = vadd.f32 0.0, %v695
        %v697 = vpop.f32.mrb[0].mxu0
        %v698 = vadd.f32 0.0, %v697
        %699 = vmatprep.mubr.bf16.mxu0 0
        %700 = vmatmul.mubr.bf16.gmra.mrb[0].mxu0 %v416
        %v701 = vpop.f32.mrb[0].mxu0
        %v702 = vadd.f32 0.0, %v701
        %v703 = vpop.f32.mrb[0].mxu0
        %v704 = vadd.f32 0.0, %v703
        %v705 = vpop.f32.mrb[0].mxu0
        %v706 = vadd.f32 0.0, %v705
        %v707 = vpop.f32.mrb[0].mxu0
        %v708 = vadd.f32 0.0, %v707
        %709 = vdwg.mxu0
        %v710 = vmax.f32 %v453, 0.0
        %v711 = vmax.f32 %v455, 0.0
        %v712 = vmax.f32 %v526, 0.0
        %v713 = vmax.f32 %v528, 0.0
        %v714 = vmax.f32 %v599, 0.0
        %v715 = vmax.f32 %v601, 0.0
        %v716 = vmax.f32 %v672, 0.0
        %v717 = vmax.f32 %v674, 0.0
        %v718 = vmax.f32 %v457, 0.0
        %v719 = vmax.f32 %v459, 0.0
        %v720 = vmax.f32 %v530, 0.0
        %v721 = vmax.f32 %v532, 0.0
        %v722 = vmax.f32 %v603, 0.0
        %v723 = vmax.f32 %v605, 0.0
        %v724 = vmax.f32 %v676, 0.0
        %v725 = vmax.f32 %v678, 0.0
        %v726 = vmax.f32 %v463, 0.0
        %v727 = vmax.f32 %v465, 0.0
        %v728 = vmax.f32 %v536, 0.0
        %v729 = vmax.f32 %v538, 0.0
        %v730 = vmax.f32 %v609, 0.0
        %v731 = vmax.f32 %v611, 0.0
        %v732 = vmax.f32 %v682, 0.0
        %v733 = vmax.f32 %v684, 0.0
        %v734 = vmax.f32 %v467, 0.0
        %v735 = vmax.f32 %v469, 0.0
        %v736 = vmax.f32 %v540, 0.0
        %v737 = vmax.f32 %v542, 0.0
        %v738 = vmax.f32 %v613, 0.0
        %v739 = vmax.f32 %v615, 0.0
        %v740 = vmax.f32 %v686, 0.0
        %v741 = vmax.f32 %v688, 0.0
        %v742 = vmax.f32 %v473, 0.0
        %v743 = vmax.f32 %v475, 0.0
        %v744 = vmax.f32 %v546, 0.0
        %v745 = vmax.f32 %v548, 0.0
        %v746 = vmax.f32 %v619, 0.0
        %v747 = vmax.f32 %v621, 0.0
        %v748 = vmax.f32 %v692, 0.0
        %v749 = vmax.f32 %v694, 0.0
        %v750 = vmax.f32 %v477, 0.0
        %v751 = vmax.f32 %v479, 0.0
        %v752 = vmax.f32 %v550, 0.0
        %v753 = vmax.f32 %v552, 0.0
        %v754 = vmax.f32 %v623, 0.0
        %v755 = vmax.f32 %v625, 0.0
        %v756 = vmax.f32 %v696, 0.0
        %v757 = vmax.f32 %v698, 0.0
        %v758 = vmax.f32 %v483, 0.0
        %v759 = vmax.f32 %v485, 0.0
        %v760 = vmax.f32 %v556, 0.0
        %v761 = vmax.f32 %v558, 0.0
        %v762 = vmax.f32 %v629, 0.0
        %v763 = vmax.f32 %v631, 0.0
        %v764 = vmax.f32 %v702, 0.0
        %v765 = vmax.f32 %v704, 0.0
        %v766 = vmax.f32 %v487, 0.0
        %v767 = vmax.f32 %v489, 0.0
        %v768 = vmax.f32 %v560, 0.0
        %v769 = vmax.f32 %v562, 0.0
        %v770 = vmax.f32 %v633, 0.0
        %v771 = vmax.f32 %v635, 0.0
        %v772 = vmax.f32 %v706, 0.0
        %v773 = vmax.f32 %v708, 0.0
        %v774 = vld [vmem:[%s2] sm:$0xf]
        %v775 = vld [vmem:[%s2 + $0x4] sm:$0xf]
        %v776 = vpack.c.bf16 %v718, %v710
        %v777 = vpack.c.bf16 %v719, %v711
        %v778 = vpack.c.bf16 %v720, %v712
        %v779 = vpack.c.bf16 %v721, %v713
        %v780 = vpack.c.bf16 %v722, %v714
        %v781 = vpack.c.bf16 %v723, %v715
        %v782 = vpack.c.bf16 %v724, %v716
        %v783 = vpack.c.bf16 %v725, %v717
        %v784 = vpack.c.bf16 %v734, %v726
        %v785 = vpack.c.bf16 %v735, %v727
        %v786 = vpack.c.bf16 %v736, %v728
        %v787 = vpack.c.bf16 %v737, %v729
        %v788 = vpack.c.bf16 %v738, %v730
        %v789 = vpack.c.bf16 %v739, %v731
        %v790 = vpack.c.bf16 %v740, %v732
        %v791 = vpack.c.bf16 %v741, %v733
        %v792 = vpack.c.bf16 %v750, %v742
        %v793 = vpack.c.bf16 %v751, %v743
        %v794 = vpack.c.bf16 %v752, %v744
        %v795 = vpack.c.bf16 %v753, %v745
        %v796 = vpack.c.bf16 %v754, %v746
        %v797 = vpack.c.bf16 %v755, %v747
        %v798 = vpack.c.bf16 %v756, %v748
        %v799 = vpack.c.bf16 %v757, %v749
        %v800 = vpack.c.bf16 %v766, %v758
        %v801 = vpack.c.bf16 %v767, %v759
        %v802 = vpack.c.bf16 %v768, %v760
        %v803 = vpack.c.bf16 %v769, %v761
        %v804 = vpack.c.bf16 %v770, %v762
        %v805 = vpack.c.bf16 %v771, %v763
        %v806 = vpack.c.bf16 %v772, %v764
        %v807 = vpack.c.bf16 %v773, %v765
        %v810 = vunpack.c.l.b16 %v774
        %v811 = vunpack.c.l.b16 %v775
        %v812 = vpack.c.b16 %v811, %v810
        %vm813 = vcmask 523264
        %v815 = vsel %vm813, %v812, 0
        %817 = vmatprep.subr.bf16.mxu0 %v777
        %818 = vmatpush1.bf16.msra.mxu0 %v776
        %819 = vmatprep.subr.bf16.mxu0 %v785
        %820 = vmatpush1.bf16.msra.mxu0 %v784
        %821 = vmatprep.subr.bf16.mxu0 %v793
        %822 = vmatpush1.bf16.msra.mxu0 %v792
        %823 = vmatprep.subr.bf16.mxu0 %v801
        %824 = vmatpush1.bf16.msra.mxu0 %v800
        %825 = vmatprep.subr.bf16.mxu0 0
        %826 = vmatpush1.bf16.msra.mxu0 0
        %827 = vmatprep.subr.bf16.mxu0 0
        %828 = vmatpush1.bf16.msra.mxu0 0
        %829 = vmatprep.subr.bf16.mxu0 0
        %830 = vmatpush1.bf16.msra.mxu0 0
        %831 = vmatprep.subr.bf16.mxu0 0
        %832 = vmatpush1.bf16.msra.mxu0 0
        %833 = vmatprep.subr.bf16.mxu0 0
        %834 = vmatpush1.bf16.msra.mxu0 0
        %835 = vmatprep.subr.bf16.mxu0 0
        %836 = vmatpush1.bf16.msra.mxu0 0
        %837 = vmatprep.subr.bf16.mxu0 0
        %838 = vmatpush1.bf16.msra.mxu0 0
        %839 = vmatprep.subr.bf16.mxu0 0
        %840 = vmatpush1.bf16.msra.mxu0 0
        %841 = vmatprep.subr.bf16.mxu0 0
        %842 = vmatpush1.bf16.msra.mxu0 0
        %843 = vmatprep.subr.bf16.mxu0 0
        %844 = vmatpush1.bf16.msra.mxu0 0
        %845 = vmatprep.subr.bf16.mxu0 0
        %846 = vmatpush1.bf16.msra.mxu0 0
        %847 = vmatprep.subr.bf16.mxu0 0
        %848 = vmatpush1.bf16.msra.mxu0 0
        %849 = vmatprep.mubr.bf16.mxu0 0
        %850 = vmatmul.mubr.bf16.gmra.mrb[0].mxu0 %v815
        %v851 = vpop.f32.mrb[0].mxu0
        %v852 = vadd.f32 0.0, %v851
        %v853 = vpop.f32.mrb[0].mxu0
        %v854 = vadd.f32 0.0, %v853
        %v855 = vpop.f32.mrb[0].mxu0
        %v856 = vadd.f32 0.0, %v855
        %v857 = vpop.f32.mrb[0].mxu0
        %v858 = vadd.f32 0.0, %v857
        %859 = vdwg.mxu0
        %860 = vmatprep.subr.bf16.mxu0 %v779
        %861 = vmatpush1.bf16.msra.mxu0 %v778
        %862 = vmatprep.subr.bf16.mxu0 %v787
        %863 = vmatpush1.bf16.msra.mxu0 %v786
        %864 = vmatprep.subr.bf16.mxu0 %v795
        %865 = vmatpush1.bf16.msra.mxu0 %v794
        %866 = vmatprep.subr.bf16.mxu0 %v803
        %867 = vmatpush1.bf16.msra.mxu0 %v802
        %868 = vmatprep.subr.bf16.mxu0 0
        %869 = vmatpush1.bf16.msra.mxu0 0
        %870 = vmatprep.subr.bf16.mxu0 0
        %871 = vmatpush1.bf16.msra.mxu0 0
        %872 = vmatprep.subr.bf16.mxu0 0
        %873 = vmatpush1.bf16.msra.mxu0 0
        %874 = vmatprep.subr.bf16.mxu0 0
        %875 = vmatpush1.bf16.msra.mxu0 0
        %876 = vmatprep.subr.bf16.mxu0 0
        %877 = vmatpush1.bf16.msra.mxu0 0
        %878 = vmatprep.subr.bf16.mxu0 0
        %879 = vmatpush1.bf16.msra.mxu0 0
        %880 = vmatprep.subr.bf16.mxu0 0
        %881 = vmatpush1.bf16.msra.mxu0 0
        %882 = vmatprep.subr.bf16.mxu0 0
        %883 = vmatpush1.bf16.msra.mxu0 0
        %884 = vmatprep.subr.bf16.mxu0 0
        %885 = vmatpush1.bf16.msra.mxu0 0
        %886 = vmatprep.subr.bf16.mxu0 0
        %887 = vmatpush1.bf16.msra.mxu0 0
        %888 = vmatprep.subr.bf16.mxu0 0
        %889 = vmatpush1.bf16.msra.mxu0 0
        %890 = vmatprep.subr.bf16.mxu0 0
        %891 = vmatpush1.bf16.msra.mxu0 0
        %892 = vmatprep.mubr.bf16.mxu0 0
        %893 = vmatmul.mubr.bf16.gmra.mrb[0].mxu0 %v815
        %v894 = vpop.f32.mrb[0].mxu0
        %v895 = vadd.f32 0.0, %v894
        %v896 = vpop.f32.mrb[0].mxu0
        %v897 = vadd.f32 0.0, %v896
        %v898 = vpop.f32.mrb[0].mxu0
        %v899 = vadd.f32 0.0, %v898
        %v900 = vpop.f32.mrb[0].mxu0
        %v901 = vadd.f32 0.0, %v900
        %902 = vdwg.mxu0
        %903 = vmatprep.subr.bf16.mxu0 %v781
        %904 = vmatpush1.bf16.msra.mxu0 %v780
        %905 = vmatprep.subr.bf16.mxu0 %v789
        %906 = vmatpush1.bf16.msra.mxu0 %v788
        %907 = vmatprep.subr.bf16.mxu0 %v797
        %908 = vmatpush1.bf16.msra.mxu0 %v796
        %909 = vmatprep.subr.bf16.mxu0 %v805
        %910 = vmatpush1.bf16.msra.mxu0 %v804
        %911 = vmatprep.subr.bf16.mxu0 0
        %912 = vmatpush1.bf16.msra.mxu0 0
        %913 = vmatprep.subr.bf16.mxu0 0
        %914 = vmatpush1.bf16.msra.mxu0 0
        %915 = vmatprep.subr.bf16.mxu0 0
        %916 = vmatpush1.bf16.msra.mxu0 0
        %917 = vmatprep.subr.bf16.mxu0 0
        %918 = vmatpush1.bf16.msra.mxu0 0
        %919 = vmatprep.subr.bf16.mxu0 0
        %920 = vmatpush1.bf16.msra.mxu0 0
        %921 = vmatprep.subr.bf16.mxu0 0
        %922 = vmatpush1.bf16.msra.mxu0 0
        %923 = vmatprep.subr.bf16.mxu0 0
        %924 = vmatpush1.bf16.msra.mxu0 0
        %925 = vmatprep.subr.bf16.mxu0 0
        %926 = vmatpush1.bf16.msra.mxu0 0
        %927 = vmatprep.subr.bf16.mxu0 0
        %928 = vmatpush1.bf16.msra.mxu0 0
        %929 = vmatprep.subr.bf16.mxu0 0
        %930 = vmatpush1.bf16.msra.mxu0 0
        %931 = vmatprep.subr.bf16.mxu0 0
        %932 = vmatpush1.bf16.msra.mxu0 0
        %933 = vmatprep.subr.bf16.mxu0 0
        %934 = vmatpush1.bf16.msra.mxu0 0
        %935 = vmatprep.mubr.bf16.mxu0 0
        %936 = vmatmul.mubr.bf16.gmra.mrb[0].mxu0 %v815
        %v937 = vpop.f32.mrb[0].mxu0
        %v938 = vadd.f32 0.0, %v937
        %v939 = vpop.f32.mrb[0].mxu0
        %v940 = vadd.f32 0.0, %v939
        %v941 = vpop.f32.mrb[0].mxu0
        %v942 = vadd.f32 0.0, %v941
        %v943 = vpop.f32.mrb[0].mxu0
        %v944 = vadd.f32 0.0, %v943
        %945 = vdwg.mxu0
        %946 = vmatprep.subr.bf16.mxu0 %v783
        %947 = vmatpush1.bf16.msra.mxu0 %v782
        %948 = vmatprep.subr.bf16.mxu0 %v791
        %949 = vmatpush1.bf16.msra.mxu0 %v790
        %950 = vmatprep.subr.bf16.mxu0 %v799
        %951 = vmatpush1.bf16.msra.mxu0 %v798
        %952 = vmatprep.subr.bf16.mxu0 %v807
        %953 = vmatpush1.bf16.msra.mxu0 %v806
        %954 = vmatprep.subr.bf16.mxu0 0
        %955 = vmatpush1.bf16.msra.mxu0 0
        %956 = vmatprep.subr.bf16.mxu0 0
        %957 = vmatpush1.bf16.msra.mxu0 0
        %958 = vmatprep.subr.bf16.mxu0 0
        %959 = vmatpush1.bf16.msra.mxu0 0
        %960 = vmatprep.subr.bf16.mxu0 0
        %961 = vmatpush1.bf16.msra.mxu0 0
        %962 = vmatprep.subr.bf16.mxu0 0
        %963 = vmatpush1.bf16.msra.mxu0 0
        %964 = vmatprep.subr.bf16.mxu0 0
        %965 = vmatpush1.bf16.msra.mxu0 0
        %966 = vmatprep.subr.bf16.mxu0 0
        %967 = vmatpush1.bf16.msra.mxu0 0
        %968 = vmatprep.subr.bf16.mxu0 0
        %969 = vmatpush1.bf16.msra.mxu0 0
        %970 = vmatprep.subr.bf16.mxu0 0
        %971 = vmatpush1.bf16.msra.mxu0 0
        %972 = vmatprep.subr.bf16.mxu0 0
        %973 = vmatpush1.bf16.msra.mxu0 0
        %974 = vmatprep.subr.bf16.mxu0 0
        %975 = vmatpush1.bf16.msra.mxu0 0
        %976 = vmatprep.subr.bf16.mxu0 0
        %977 = vmatpush1.bf16.msra.mxu0 0
        %978 = vmatprep.mubr.bf16.mxu0 0
        %979 = vmatmul.mubr.bf16.gmra.mrb[0].mxu0 %v815
        %v980 = vpop.f32.mrb[0].mxu0
        %v981 = vadd.f32 0.0, %v980
        %v982 = vpop.f32.mrb[0].mxu0
        %v983 = vadd.f32 0.0, %v982
        %v984 = vpop.f32.mrb[0].mxu0
        %v985 = vadd.f32 0.0, %v984
        %v986 = vpop.f32.mrb[0].mxu0
        %v987 = vadd.f32 0.0, %v986
        %988 = vdwg.mxu0
        %v989 = vmax.f32 %v852, 0.0
        %v990 = vmax.f32 %v854, 0.0
        %v991 = vmax.f32 %v895, 0.0
        %v992 = vmax.f32 %v897, 0.0
        %v993 = vmax.f32 %v938, 0.0
        %v994 = vmax.f32 %v940, 0.0
        %v995 = vmax.f32 %v981, 0.0
        %v996 = vmax.f32 %v983, 0.0
        %v997 = vmax.f32 %v856, 0.0
        %v998 = vmax.f32 %v858, 0.0
        %v999 = vmax.f32 %v899, 0.0
        %v1000 = vmax.f32 %v901, 0.0
        %v1001 = vmax.f32 %v942, 0.0
        %v1002 = vmax.f32 %v944, 0.0
        %v1003 = vmax.f32 %v985, 0.0
        %v1004 = vmax.f32 %v987, 0.0
        %v1005 = vpack.c.bf16 %v997, %v989
        %v1006 = vpack.c.bf16 %v998, %v990
        %v1007 = vpack.c.bf16 %v999, %v991
        %v1008 = vpack.c.bf16 %v1000, %v992
        %v1009 = vpack.c.bf16 %v1001, %v993
        %v1010 = vpack.c.bf16 %v1002, %v994
        %v1011 = vpack.c.bf16 %v1003, %v995
        %v1012 = vpack.c.bf16 %v1004, %v996
        %v1021 = vunpack.c.l.b16 %v289
        %v1022 = vunpack.c.h.b16 %v289
        %v1023 = vunpack.c.l.b16 %v290
        %v1024 = vunpack.c.h.b16 %v290
        %v1025 = vunpack.c.l.b16 %v291
        %v1026 = vunpack.c.h.b16 %v291
        %v1027 = vunpack.c.l.b16 %v292
        %v1028 = vunpack.c.h.b16 %v292
        %v1029 = vunpack.c.l.b16 %v293
        %v1030 = vunpack.c.h.b16 %v293
        %v1031 = vunpack.c.l.b16 %v294
        %v1032 = vunpack.c.h.b16 %v294
        %v1033 = vunpack.c.l.b16 %v295
        %v1034 = vunpack.c.h.b16 %v295
        %v1035 = vunpack.c.l.b16 %v296
        %v1036 = vunpack.c.h.b16 %v296
        %v1037 = vpack.c.b16 %v1029, %v1021
        %v1038 = vpack.c.b16 %v1030, %v1022
        %v1039 = vpack.c.b16 %v1031, %v1023
        %v1040 = vpack.c.b16 %v1032, %v1024
        %v1041 = vpack.c.b16 %v1033, %v1025
        %v1042 = vpack.c.b16 %v1034, %v1026
        %v1043 = vpack.c.b16 %v1035, %v1027
        %v1044 = vpack.c.b16 %v1036, %v1028
        %v1053 = vld [vmem:[%s3] sm:$0xf]
        %v1054 = vld [vmem:[%s3 + $0x4] sm:$0xf]
        %v1055 = vld [vmem:[%s3 + $0x8] sm:$0xf]
        %v1056 = vld [vmem:[%s3 + $0xc] sm:$0xf]
        %v1057 = vld [vmem:[%s3 + $0x10] sm:$0xf]
        %v1058 = vld [vmem:[%s3 + $0x14] sm:$0xf]
        %v1059 = vld [vmem:[%s3 + $0x18] sm:$0xf]
        %v1060 = vld [vmem:[%s3 + $0x1c] sm:$0xf]
        %v1069 = vunpack.c.l.b16 %v1053
        %v1070 = vunpack.c.l.b16 %v1054
        %v1071 = vunpack.c.l.b16 %v1055
        %v1072 = vunpack.c.l.b16 %v1056
        %v1073 = vunpack.c.l.b16 %v1057
        %v1074 = vunpack.c.l.b16 %v1058
        %v1075 = vunpack.c.l.b16 %v1059
        %v1076 = vunpack.c.l.b16 %v1060
        %v1077 = vpack.c.b16 %v1070, %v1069
        %v1078 = vpack.c.b16 %v1072, %v1071
        %v1079 = vpack.c.b16 %v1074, %v1073
        %v1080 = vpack.c.b16 %v1076, %v1075
        %v1082 = vsel %vm405, %v1077, 0
        %v1085 = vsel %vm405, %v1078, 0
        %v1088 = vsel %vm405, %v1079, 0
        %v1091 = vsel %vm405, %v1080, 0
        %1093 = vmatprep.subr.bf16.mxu0 %v1006
        %1094 = vmatpush1.bf16.msra.mxu0 %v1005
        %1095 = vmatprep.subr.bf16.mxu0 %v1038
        %1096 = vmatpush1.bf16.msra.mxu0 %v1037
        %1097 = vmatprep.subr.bf16.mxu0 0
        %1098 = vmatpush1.bf16.msra.mxu0 0
        %1099 = vmatprep.subr.bf16.mxu0 0
        %1100 = vmatpush1.bf16.msra.mxu0 0
        %1101 = vmatprep.subr.bf16.mxu0 0
        %1102 = vmatpush1.bf16.msra.mxu0 0
        %1103 = vmatprep.subr.bf16.mxu0 0
        %1104 = vmatpush1.bf16.msra.mxu0 0
        %1105 = vmatprep.subr.bf16.mxu0 0
        %1106 = vmatpush1.bf16.msra.mxu0 0
        %1107 = vmatprep.subr.bf16.mxu0 0
        %1108 = vmatpush1.bf16.msra.mxu0 0
        %1109 = vmatprep.subr.bf16.mxu0 0
        %1110 = vmatpush1.bf16.msra.mxu0 0
        %1111 = vmatprep.subr.bf16.mxu0 0
        %1112 = vmatpush1.bf16.msra.mxu0 0
        %1113 = vmatprep.subr.bf16.mxu0 0
        %1114 = vmatpush1.bf16.msra.mxu0 0
        %1115 = vmatprep.subr.bf16.mxu0 0
        %1116 = vmatpush1.bf16.msra.mxu0 0
        %1117 = vmatprep.subr.bf16.mxu0 0
        %1118 = vmatpush1.bf16.msra.mxu0 0
        %1119 = vmatprep.subr.bf16.mxu0 0
        %1120 = vmatpush1.bf16.msra.mxu0 0
        %1121 = vmatprep.subr.bf16.mxu0 0
        %1122 = vmatpush1.bf16.msra.mxu0 0
        %1123 = vmatprep.subr.bf16.mxu0 0
        %1124 = vmatpush1.bf16.msra.mxu0 0
        %1125 = vmatprep.mubr.bf16.mxu0 0
        %1126 = vmatmul.mubr.bf16.gmra.mrb[0].mxu0 %v1082
        %v1127 = vpop.f32.mrb[0].mxu0
        %v1128 = vadd.f32 0.0, %v1127
        %v1129 = vpop.f32.mrb[0].mxu0
        %v1130 = vadd.f32 0.0, %v1129
        %v1131 = vpop.f32.mrb[0].mxu0
        %v1132 = vadd.f32 0.0, %v1131
        %v1133 = vpop.f32.mrb[0].mxu0
        %v1134 = vadd.f32 0.0, %v1133
        %1135 = vmatprep.mubr.bf16.mxu0 0
        %1136 = vmatmul.mubr.bf16.gmra.mrb[0].mxu0 %v1085
        %v1137 = vpop.f32.mrb[0].mxu0
        %v1138 = vadd.f32 0.0, %v1137
        %v1139 = vpop.f32.mrb[0].mxu0
        %v1140 = vadd.f32 0.0, %v1139
        %v1141 = vpop.f32.mrb[0].mxu0
        %v1142 = vadd.f32 0.0, %v1141
        %v1143 = vpop.f32.mrb[0].mxu0
        %v1144 = vadd.f32 0.0, %v1143
        %1145 = vmatprep.mubr.bf16.mxu0 0
        %1146 = vmatmul.mubr.bf16.gmra.mrb[0].mxu0 %v1088
        %v1147 = vpop.f32.mrb[0].mxu0
        %v1148 = vadd.f32 0.0, %v1147
        %v1149 = vpop.f32.mrb[0].mxu0
        %v1150 = vadd.f32 0.0, %v1149
        %v1151 = vpop.f32.mrb[0].mxu0
        %v1152 = vadd.f32 0.0, %v1151
        %v1153 = vpop.f32.mrb[0].mxu0
        %v1154 = vadd.f32 0.0, %v1153
        %1155 = vmatprep.mubr.bf16.mxu0 0
        %1156 = vmatmul.mubr.bf16.gmra.mrb[0].mxu0 %v1091
        %v1157 = vpop.f32.mrb[0].mxu0
        %v1158 = vadd.f32 0.0, %v1157
        %v1159 = vpop.f32.mrb[0].mxu0
        %v1160 = vadd.f32 0.0, %v1159
        %v1161 = vpop.f32.mrb[0].mxu0
        %v1162 = vadd.f32 0.0, %v1161
        %v1163 = vpop.f32.mrb[0].mxu0
        %v1164 = vadd.f32 0.0, %v1163
        %1165 = vdwg.mxu0
        %1166 = vmatprep.subr.bf16.mxu0 %v1008
        %1167 = vmatpush1.bf16.msra.mxu0 %v1007
        %1168 = vmatprep.subr.bf16.mxu0 %v1040
        %1169 = vmatpush1.bf16.msra.mxu0 %v1039
        %1170 = vmatprep.subr.bf16.mxu0 0
        %1171 = vmatpush1.bf16.msra.mxu0 0
        %1172 = vmatprep.subr.bf16.mxu0 0
        %1173 = vmatpush1.bf16.msra.mxu0 0
        %1174 = vmatprep.subr.bf16.mxu0 0
        %1175 = vmatpush1.bf16.msra.mxu0 0
        %1176 = vmatprep.subr.bf16.mxu0 0
        %1177 = vmatpush1.bf16.msra.mxu0 0
        %1178 = vmatprep.subr.bf16.mxu0 0
        %1179 = vmatpush1.bf16.msra.mxu0 0
        %1180 = vmatprep.subr.bf16.mxu0 0
        %1181 = vmatpush1.bf16.msra.mxu0 0
        %1182 = vmatprep.subr.bf16.mxu0 0
        %1183 = vmatpush1.bf16.msra.mxu0 0
        %1184 = vmatprep.subr.bf16.mxu0 0
        %1185 = vmatpush1.bf16.msra.mxu0 0
        %1186 = vmatprep.subr.bf16.mxu0 0
        %1187 = vmatpush1.bf16.msra.mxu0 0
        %1188 = vmatprep.subr.bf16.mxu0 0
        %1189 = vmatpush1.bf16.msra.mxu0 0
        %1190 = vmatprep.subr.bf16.mxu0 0
        %1191 = vmatpush1.bf16.msra.mxu0 0
        %1192 = vmatprep.subr.bf16.mxu0 0
        %1193 = vmatpush1.bf16.msra.mxu0 0
        %1194 = vmatprep.subr.bf16.mxu0 0
        %1195 = vmatpush1.bf16.msra.mxu0 0
        %1196 = vmatprep.subr.bf16.mxu0 0
        %1197 = vmatpush1.bf16.msra.mxu0 0
        %1198 = vmatprep.mubr.bf16.mxu0 0
        %1199 = vmatmul.mubr.bf16.gmra.mrb[0].mxu0 %v1082
        %v1200 = vpop.f32.mrb[0].mxu0
        %v1201 = vadd.f32 0.0, %v1200
        %v1202 = vpop.f32.mrb[0].mxu0
        %v1203 = vadd.f32 0.0, %v1202
        %v1204 = vpop.f32.mrb[0].mxu0
        %v1205 = vadd.f32 0.0, %v1204
        %v1206 = vpop.f32.mrb[0].mxu0
        %v1207 = vadd.f32 0.0, %v1206
        %1208 = vmatprep.mubr.bf16.mxu0 0
        %1209 = vmatmul.mubr.bf16.gmra.mrb[0].mxu0 %v1085
        %v1210 = vpop.f32.mrb[0].mxu0
        %v1211 = vadd.f32 0.0, %v1210
        %v1212 = vpop.f32.mrb[0].mxu0
        %v1213 = vadd.f32 0.0, %v1212
        %v1214 = vpop.f32.mrb[0].mxu0
        %v1215 = vadd.f32 0.0, %v1214
        %v1216 = vpop.f32.mrb[0].mxu0
        %v1217 = vadd.f32 0.0, %v1216
        %1218 = vmatprep.mubr.bf16.mxu0 0
        %1219 = vmatmul.mubr.bf16.gmra.mrb[0].mxu0 %v1088
        %v1220 = vpop.f32.mrb[0].mxu0
        %v1221 = vadd.f32 0.0, %v1220
        %v1222 = vpop.f32.mrb[0].mxu0
        %v1223 = vadd.f32 0.0, %v1222
        %v1224 = vpop.f32.mrb[0].mxu0
        %v1225 = vadd.f32 0.0, %v1224
        %v1226 = vpop.f32.mrb[0].mxu0
        %v1227 = vadd.f32 0.0, %v1226
        %1228 = vmatprep.mubr.bf16.mxu0 0
        %1229 = vmatmul.mubr.bf16.gmra.mrb[0].mxu0 %v1091
        %v1230 = vpop.f32.mrb[0].mxu0
        %v1231 = vadd.f32 0.0, %v1230
        %v1232 = vpop.f32.mrb[0].mxu0
        %v1233 = vadd.f32 0.0, %v1232
        %v1234 = vpop.f32.mrb[0].mxu0
        %v1235 = vadd.f32 0.0, %v1234
        %v1236 = vpop.f32.mrb[0].mxu0
        %v1237 = vadd.f32 0.0, %v1236
        %1238 = vdwg.mxu0
        %1239 = vmatprep.subr.bf16.mxu0 %v1010
        %1240 = vmatpush1.bf16.msra.mxu0 %v1009
        %1241 = vmatprep.subr.bf16.mxu0 %v1042
        %1242 = vmatpush1.bf16.msra.mxu0 %v1041
        %1243 = vmatprep.subr.bf16.mxu0 0
        %1244 = vmatpush1.bf16.msra.mxu0 0
        %1245 = vmatprep.subr.bf16.mxu0 0
        %1246 = vmatpush1.bf16.msra.mxu0 0
        %1247 = vmatprep.subr.bf16.mxu0 0
        %1248 = vmatpush1.bf16.msra.mxu0 0
        %1249 = vmatprep.subr.bf16.mxu0 0
        %1250 = vmatpush1.bf16.msra.mxu0 0
        %1251 = vmatprep.subr.bf16.mxu0 0
        %1252 = vmatpush1.bf16.msra.mxu0 0
        %1253 = vmatprep.subr.bf16.mxu0 0
        %1254 = vmatpush1.bf16.msra.mxu0 0
        %1255 = vmatprep.subr.bf16.mxu0 0
        %1256 = vmatpush1.bf16.msra.mxu0 0
        %1257 = vmatprep.subr.bf16.mxu0 0
        %1258 = vmatpush1.bf16.msra.mxu0 0
        %1259 = vmatprep.subr.bf16.mxu0 0
        %1260 = vmatpush1.bf16.msra.mxu0 0
        %1261 = vmatprep.subr.bf16.mxu0 0
        %1262 = vmatpush1.bf16.msra.mxu0 0
        %1263 = vmatprep.subr.bf16.mxu0 0
        %1264 = vmatpush1.bf16.msra.mxu0 0
        %1265 = vmatprep.subr.bf16.mxu0 0
        %1266 = vmatpush1.bf16.msra.mxu0 0
        %1267 = vmatprep.subr.bf16.mxu0 0
        %1268 = vmatpush1.bf16.msra.mxu0 0
        %1269 = vmatprep.subr.bf16.mxu0 0
        %1270 = vmatpush1.bf16.msra.mxu0 0
        %1271 = vmatprep.mubr.bf16.mxu0 0
        %1272 = vmatmul.mubr.bf16.gmra.mrb[0].mxu0 %v1082
        %v1273 = vpop.f32.mrb[0].mxu0
        %v1274 = vadd.f32 0.0, %v1273
        %v1275 = vpop.f32.mrb[0].mxu0
        %v1276 = vadd.f32 0.0, %v1275
        %v1277 = vpop.f32.mrb[0].mxu0
        %v1278 = vadd.f32 0.0, %v1277
        %v1279 = vpop.f32.mrb[0].mxu0
        %v1280 = vadd.f32 0.0, %v1279
        %1281 = vmatprep.mubr.bf16.mxu0 0
        %1282 = vmatmul.mubr.bf16.gmra.mrb[0].mxu0 %v1085
        %v1283 = vpop.f32.mrb[0].mxu0
        %v1284 = vadd.f32 0.0, %v1283
        %v1285 = vpop.f32.mrb[0].mxu0
        %v1286 = vadd.f32 0.0, %v1285
        %v1287 = vpop.f32.mrb[0].mxu0
        %v1288 = vadd.f32 0.0, %v1287
        %v1289 = vpop.f32.mrb[0].mxu0
        %v1290 = vadd.f32 0.0, %v1289
        %1291 = vmatprep.mubr.bf16.mxu0 0
        %1292 = vmatmul.mubr.bf16.gmra.mrb[0].mxu0 %v1088
        %v1293 = vpop.f32.mrb[0].mxu0
        %v1294 = vadd.f32 0.0, %v1293
        %v1295 = vpop.f32.mrb[0].mxu0
        %v1296 = vadd.f32 0.0, %v1295
        %v1297 = vpop.f32.mrb[0].mxu0
        %v1298 = vadd.f32 0.0, %v1297
        %v1299 = vpop.f32.mrb[0].mxu0
        %v1300 = vadd.f32 0.0, %v1299
        %1301 = vmatprep.mubr.bf16.mxu0 0
        %1302 = vmatmul.mubr.bf16.gmra.mrb[0].mxu0 %v1091
        %v1303 = vpop.f32.mrb[0].mxu0
        %v1304 = vadd.f32 0.0, %v1303
        %v1305 = vpop.f32.mrb[0].mxu0
        %v1306 = vadd.f32 0.0, %v1305
        %v1307 = vpop.f32.mrb[0].mxu0
        %v1308 = vadd.f32 0.0, %v1307
        %v1309 = vpop.f32.mrb[0].mxu0
        %v1310 = vadd.f32 0.0, %v1309
        %1311 = vdwg.mxu0
        %1312 = vmatprep.subr.bf16.mxu0 %v1012
        %1313 = vmatpush1.bf16.msra.mxu0 %v1011
        %1314 = vmatprep.subr.bf16.mxu0 %v1044
        %1315 = vmatpush1.bf16.msra.mxu0 %v1043
        %1316 = vmatprep.subr.bf16.mxu0 0
        %1317 = vmatpush1.bf16.msra.mxu0 0
        %1318 = vmatprep.subr.bf16.mxu0 0
        %1319 = vmatpush1.bf16.msra.mxu0 0
        %1320 = vmatprep.subr.bf16.mxu0 0
        %1321 = vmatpush1.bf16.msra.mxu0 0
        %1322 = vmatprep.subr.bf16.mxu0 0
        %1323 = vmatpush1.bf16.msra.mxu0 0
        %1324 = vmatprep.subr.bf16.mxu0 0
        %1325 = vmatpush1.bf16.msra.mxu0 0
        %1326 = vmatprep.subr.bf16.mxu0 0
        %1327 = vmatpush1.bf16.msra.mxu0 0
        %1328 = vmatprep.subr.bf16.mxu0 0
        %1329 = vmatpush1.bf16.msra.mxu0 0
        %1330 = vmatprep.subr.bf16.mxu0 0
        %1331 = vmatpush1.bf16.msra.mxu0 0
        %1332 = vmatprep.subr.bf16.mxu0 0
        %1333 = vmatpush1.bf16.msra.mxu0 0
        %1334 = vmatprep.subr.bf16.mxu0 0
        %1335 = vmatpush1.bf16.msra.mxu0 0
        %1336 = vmatprep.subr.bf16.mxu0 0
        %1337 = vmatpush1.bf16.msra.mxu0 0
        %1338 = vmatprep.subr.bf16.mxu0 0
        %1339 = vmatpush1.bf16.msra.mxu0 0
        %1340 = vmatprep.subr.bf16.mxu0 0
        %1341 = vmatpush1.bf16.msra.mxu0 0
        %1342 = vmatprep.subr.bf16.mxu0 0
        %1343 = vmatpush1.bf16.msra.mxu0 0
        %1344 = vmatprep.mubr.bf16.mxu0 0
        %1345 = vmatmul.mubr.bf16.gmra.mrb[0].mxu0 %v1082
        %v1346 = vpop.f32.mrb[0].mxu0
        %v1347 = vadd.f32 0.0, %v1346
        %v1348 = vpop.f32.mrb[0].mxu0
        %v1349 = vadd.f32 0.0, %v1348
        %v1350 = vpop.f32.mrb[0].mxu0
        %v1351 = vadd.f32 0.0, %v1350
        %v1352 = vpop.f32.mrb[0].mxu0
        %v1353 = vadd.f32 0.0, %v1352
        %1354 = vmatprep.mubr.bf16.mxu0 0
        %1355 = vmatmul.mubr.bf16.gmra.mrb[0].mxu0 %v1085
        %v1356 = vpop.f32.mrb[0].mxu0
        %v1357 = vadd.f32 0.0, %v1356
        %v1358 = vpop.f32.mrb[0].mxu0
        %v1359 = vadd.f32 0.0, %v1358
        %v1360 = vpop.f32.mrb[0].mxu0
        %v1361 = vadd.f32 0.0, %v1360
        %v1362 = vpop.f32.mrb[0].mxu0
        %v1363 = vadd.f32 0.0, %v1362
        %1364 = vmatprep.mubr.bf16.mxu0 0
        %1365 = vmatmul.mubr.bf16.gmra.mrb[0].mxu0 %v1088
        %v1366 = vpop.f32.mrb[0].mxu0
        %v1367 = vadd.f32 0.0, %v1366
        %v1368 = vpop.f32.mrb[0].mxu0
        %v1369 = vadd.f32 0.0, %v1368
        %v1370 = vpop.f32.mrb[0].mxu0
        %v1371 = vadd.f32 0.0, %v1370
        %v1372 = vpop.f32.mrb[0].mxu0
        %v1373 = vadd.f32 0.0, %v1372
        %1374 = vmatprep.mubr.bf16.mxu0 0
        %1375 = vmatmul.mubr.bf16.gmra.mrb[0].mxu0 %v1091
        %v1376 = vpop.f32.mrb[0].mxu0
        %v1377 = vadd.f32 0.0, %v1376
        %v1378 = vpop.f32.mrb[0].mxu0
        %v1379 = vadd.f32 0.0, %v1378
        %v1380 = vpop.f32.mrb[0].mxu0
        %v1381 = vadd.f32 0.0, %v1380
        %v1382 = vpop.f32.mrb[0].mxu0
        %v1383 = vadd.f32 0.0, %v1382
        %1384 = vdwg.mxu0
        %v1385 = vmax.f32 %v1128, 0.0
        %v1386 = vmax.f32 %v1130, 0.0
        %v1387 = vmax.f32 %v1201, 0.0
        %v1388 = vmax.f32 %v1203, 0.0
        %v1389 = vmax.f32 %v1274, 0.0
        %v1390 = vmax.f32 %v1276, 0.0
        %v1391 = vmax.f32 %v1347, 0.0
        %v1392 = vmax.f32 %v1349, 0.0
        %v1393 = vmax.f32 %v1132, 0.0
        %v1394 = vmax.f32 %v1134, 0.0
        %v1395 = vmax.f32 %v1205, 0.0
        %v1396 = vmax.f32 %v1207, 0.0
        %v1397 = vmax.f32 %v1278, 0.0
        %v1398 = vmax.f32 %v1280, 0.0
        %v1399 = vmax.f32 %v1351, 0.0
        %v1400 = vmax.f32 %v1353, 0.0
        %v1401 = vmax.f32 %v1138, 0.0
        %v1402 = vmax.f32 %v1140, 0.0
        %v1403 = vmax.f32 %v1211, 0.0
        %v1404 = vmax.f32 %v1213, 0.0
        %v1405 = vmax.f32 %v1284, 0.0
        %v1406 = vmax.f32 %v1286, 0.0
        %v1407 = vmax.f32 %v1357, 0.0
        %v1408 = vmax.f32 %v1359, 0.0
        %v1409 = vmax.f32 %v1142, 0.0
        %v1410 = vmax.f32 %v1144, 0.0
        %v1411 = vmax.f32 %v1215, 0.0
        %v1412 = vmax.f32 %v1217, 0.0
        %v1413 = vmax.f32 %v1288, 0.0
        %v1414 = vmax.f32 %v1290, 0.0
        %v1415 = vmax.f32 %v1361, 0.0
        %v1416 = vmax.f32 %v1363, 0.0
        %v1417 = vmax.f32 %v1148, 0.0
        %v1418 = vmax.f32 %v1150, 0.0
        %v1419 = vmax.f32 %v1221, 0.0
        %v1420 = vmax.f32 %v1223, 0.0
        %v1421 = vmax.f32 %v1294, 0.0
        %v1422 = vmax.f32 %v1296, 0.0
        %v1423 = vmax.f32 %v1367, 0.0
        %v1424 = vmax.f32 %v1369, 0.0
        %v1425 = vmax.f32 %v1152, 0.0
        %v1426 = vmax.f32 %v1154, 0.0
        %v1427 = vmax.f32 %v1225, 0.0
        %v1428 = vmax.f32 %v1227, 0.0
        %v1429 = vmax.f32 %v1298, 0.0
        %v1430 = vmax.f32 %v1300, 0.0
        %v1431 = vmax.f32 %v1371, 0.0
        %v1432 = vmax.f32 %v1373, 0.0
        %v1433 = vmax.f32 %v1158, 0.0
        %v1434 = vmax.f32 %v1160, 0.0
        %v1435 = vmax.f32 %v1231, 0.0
        %v1436 = vmax.f32 %v1233, 0.0
        %v1437 = vmax.f32 %v1304, 0.0
        %v1438 = vmax.f32 %v1306, 0.0
        %v1439 = vmax.f32 %v1377, 0.0
        %v1440 = vmax.f32 %v1379, 0.0
        %v1441 = vmax.f32 %v1162, 0.0
        %v1442 = vmax.f32 %v1164, 0.0
        %v1443 = vmax.f32 %v1235, 0.0
        %v1444 = vmax.f32 %v1237, 0.0
        %v1445 = vmax.f32 %v1308, 0.0
        %v1446 = vmax.f32 %v1310, 0.0
        %v1447 = vmax.f32 %v1381, 0.0
        %v1448 = vmax.f32 %v1383, 0.0
        %v1449 = vld [vmem:[%s4] sm:$0xf]
        %v1450 = vld [vmem:[%s4 + $0x4] sm:$0xf]
        %v1451 = vld [vmem:[%s4 + $0x8] sm:$0xf]
        %v1452 = vld [vmem:[%s4 + $0xc] sm:$0xf]
        %v1453 = vld [vmem:[%s4 + $0x10] sm:$0xf]
        %v1454 = vld [vmem:[%s4 + $0x14] sm:$0xf]
        %v1455 = vld [vmem:[%s4 + $0x18] sm:$0xf]
        %v1456 = vld [vmem:[%s4 + $0x1c] sm:$0xf]
        %v1457 = vpack.c.bf16 %v1393, %v1385
        %v1458 = vpack.c.bf16 %v1394, %v1386
        %v1459 = vpack.c.bf16 %v1395, %v1387
        %v1460 = vpack.c.bf16 %v1396, %v1388
        %v1461 = vpack.c.bf16 %v1397, %v1389
        %v1462 = vpack.c.bf16 %v1398, %v1390
        %v1463 = vpack.c.bf16 %v1399, %v1391
        %v1464 = vpack.c.bf16 %v1400, %v1392
        %v1465 = vpack.c.bf16 %v1409, %v1401
        %v1466 = vpack.c.bf16 %v1410, %v1402
        %v1467 = vpack.c.bf16 %v1411, %v1403
        %v1468 = vpack.c.bf16 %v1412, %v1404
        %v1469 = vpack.c.bf16 %v1413, %v1405
        %v1470 = vpack.c.bf16 %v1414, %v1406
        %v1471 = vpack.c.bf16 %v1415, %v1407
        %v1472 = vpack.c.bf16 %v1416, %v1408
        %v1473 = vpack.c.bf16 %v1425, %v1417
        %v1474 = vpack.c.bf16 %v1426, %v1418
        %v1475 = vpack.c.bf16 %v1427, %v1419
        %v1476 = vpack.c.bf16 %v1428, %v1420
        %v1477 = vpack.c.bf16 %v1429, %v1421
        %v1478 = vpack.c.bf16 %v1430, %v1422
        %v1479 = vpack.c.bf16 %v1431, %v1423
        %v1480 = vpack.c.bf16 %v1432, %v1424
        %v1481 = vpack.c.bf16 %v1441, %v1433
        %v1482 = vpack.c.bf16 %v1442, %v1434
        %v1483 = vpack.c.bf16 %v1443, %v1435
        %v1484 = vpack.c.bf16 %v1444, %v1436
        %v1485 = vpack.c.bf16 %v1445, %v1437
        %v1486 = vpack.c.bf16 %v1446, %v1438
        %v1487 = vpack.c.bf16 %v1447, %v1439
        %v1488 = vpack.c.bf16 %v1448, %v1440
        %v1497 = vunpack.c.l.b16 %v1449
        %v1498 = vunpack.c.l.b16 %v1450
        %v1499 = vunpack.c.l.b16 %v1451
        %v1500 = vunpack.c.l.b16 %v1452
        %v1501 = vunpack.c.l.b16 %v1453
        %v1502 = vunpack.c.l.b16 %v1454
        %v1503 = vunpack.c.l.b16 %v1455
        %v1504 = vunpack.c.l.b16 %v1456
        %v1505 = vpack.c.b16 %v1498, %v1497
        %v1506 = vpack.c.b16 %v1500, %v1499
        %v1507 = vpack.c.b16 %v1502, %v1501
        %v1508 = vpack.c.b16 %v1504, %v1503
        %v1510 = vsel %vm813, %v1505, 0
        %v1513 = vsel %vm813, %v1506, 0
        %v1516 = vsel %vm813, %v1507, 0
        %v1519 = vsel %vm813, %v1508, 0
        %1521 = vmatprep.subr.bf16.mxu0 %v1458
        %1522 = vmatpush1.bf16.msra.mxu0 %v1457
        %1523 = vmatprep.subr.bf16.mxu0 %v1466
        %1524 = vmatpush1.bf16.msra.mxu0 %v1465
        %1525 = vmatprep.subr.bf16.mxu0 %v1474
        %1526 = vmatpush1.bf16.msra.mxu0 %v1473
        %1527 = vmatprep.subr.bf16.mxu0 %v1482
        %1528 = vmatpush1.bf16.msra.mxu0 %v1481
        %1529 = vmatprep.subr.bf16.mxu0 0
        %1530 = vmatpush1.bf16.msra.mxu0 0
        %1531 = vmatprep.subr.bf16.mxu0 0
        %1532 = vmatpush1.bf16.msra.mxu0 0
        %1533 = vmatprep.subr.bf16.mxu0 0
        %1534 = vmatpush1.bf16.msra.mxu0 0
        %1535 = vmatprep.subr.bf16.mxu0 0
        %1536 = vmatpush1.bf16.msra.mxu0 0
        %1537 = vmatprep.subr.bf16.mxu0 0
        %1538 = vmatpush1.bf16.msra.mxu0 0
        %1539 = vmatprep.subr.bf16.mxu0 0
        %1540 = vmatpush1.bf16.msra.mxu0 0
        %1541 = vmatprep.subr.bf16.mxu0 0
        %1542 = vmatpush1.bf16.msra.mxu0 0
        %1543 = vmatprep.subr.bf16.mxu0 0
        %1544 = vmatpush1.bf16.msra.mxu0 0
        %1545 = vmatprep.subr.bf16.mxu0 0
        %1546 = vmatpush1.bf16.msra.mxu0 0
        %1547 = vmatprep.subr.bf16.mxu0 0
        %1548 = vmatpush1.bf16.msra.mxu0 0
        %1549 = vmatprep.subr.bf16.mxu0 0
        %1550 = vmatpush1.bf16.msra.mxu0 0
        %1551 = vmatprep.subr.bf16.mxu0 0
        %1552 = vmatpush1.bf16.msra.mxu0 0
        %1553 = vmatprep.mubr.bf16.mxu0 0
        %1554 = vmatmul.mubr.bf16.gmra.mrb[0].mxu0 %v1510
        %v1555 = vpop.f32.mrb[0].mxu0
        %v1556 = vadd.f32 0.0, %v1555
        %v1557 = vpop.f32.mrb[0].mxu0
        %v1558 = vadd.f32 0.0, %v1557
        %v1559 = vpop.f32.mrb[0].mxu0
        %v1560 = vadd.f32 0.0, %v1559
        %v1561 = vpop.f32.mrb[0].mxu0
        %v1562 = vadd.f32 0.0, %v1561
        %1563 = vmatprep.mubr.bf16.mxu0 0
        %1564 = vmatmul.mubr.bf16.gmra.mrb[0].mxu0 %v1513
        %v1565 = vpop.f32.mrb[0].mxu0
        %v1566 = vadd.f32 0.0, %v1565
        %v1567 = vpop.f32.mrb[0].mxu0
        %v1568 = vadd.f32 0.0, %v1567
        %v1569 = vpop.f32.mrb[0].mxu0
        %v1570 = vadd.f32 0.0, %v1569
        %v1571 = vpop.f32.mrb[0].mxu0
        %v1572 = vadd.f32 0.0, %v1571
        %1573 = vmatprep.mubr.bf16.mxu0 0
        %1574 = vmatmul.mubr.bf16.gmra.mrb[0].mxu0 %v1516
        %v1575 = vpop.f32.mrb[0].mxu0
        %v1576 = vadd.f32 0.0, %v1575
        %v1577 = vpop.f32.mrb[0].mxu0
        %v1578 = vadd.f32 0.0, %v1577
        %v1579 = vpop.f32.mrb[0].mxu0
        %v1580 = vadd.f32 0.0, %v1579
        %v1581 = vpop.f32.mrb[0].mxu0
        %v1582 = vadd.f32 0.0, %v1581
        %1583 = vmatprep.mubr.bf16.mxu0 0
        %1584 = vmatmul.mubr.bf16.gmra.mrb[0].mxu0 %v1519
        %v1585 = vpop.f32.mrb[0].mxu0
        %v1586 = vadd.f32 0.0, %v1585
        %v1587 = vpop.f32.mrb[0].mxu0
        %v1588 = vadd.f32 0.0, %v1587
        %v1589 = vpop.f32.mrb[0].mxu0
        %v1590 = vadd.f32 0.0, %v1589
        %v1591 = vpop.f32.mrb[0].mxu0
        %v1592 = vadd.f32 0.0, %v1591
        %1593 = vdwg.mxu0
        %1594 = vmatprep.subr.bf16.mxu0 %v1460
        %1595 = vmatpush1.bf16.msra.mxu0 %v1459
        %1596 = vmatprep.subr.bf16.mxu0 %v1468
        %1597 = vmatpush1.bf16.msra.mxu0 %v1467
        %1598 = vmatprep.subr.bf16.mxu0 %v1476
        %1599 = vmatpush1.bf16.msra.mxu0 %v1475
        %1600 = vmatprep.subr.bf16.mxu0 %v1484
        %1601 = vmatpush1.bf16.msra.mxu0 %v1483
        %1602 = vmatprep.subr.bf16.mxu0 0
        %1603 = vmatpush1.bf16.msra.mxu0 0
        %1604 = vmatprep.subr.bf16.mxu0 0
        %1605 = vmatpush1.bf16.msra.mxu0 0
        %1606 = vmatprep.subr.bf16.mxu0 0
        %1607 = vmatpush1.bf16.msra.mxu0 0
        %1608 = vmatprep.subr.bf16.mxu0 0
        %1609 = vmatpush1.bf16.msra.mxu0 0
        %1610 = vmatprep.subr.bf16.mxu0 0
        %1611 = vmatpush1.bf16.msra.mxu0 0
        %1612 = vmatprep.subr.bf16.mxu0 0
        %1613 = vmatpush1.bf16.msra.mxu0 0
        %1614 = vmatprep.subr.bf16.mxu0 0
        %1615 = vmatpush1.bf16.msra.mxu0 0
        %1616 = vmatprep.subr.bf16.mxu0 0
        %1617 = vmatpush1.bf16.msra.mxu0 0
        %1618 = vmatprep.subr.bf16.mxu0 0
        %1619 = vmatpush1.bf16.msra.mxu0 0
        %1620 = vmatprep.subr.bf16.mxu0 0
        %1621 = vmatpush1.bf16.msra.mxu0 0
        %1622 = vmatprep.subr.bf16.mxu0 0
        %1623 = vmatpush1.bf16.msra.mxu0 0
        %1624 = vmatprep.subr.bf16.mxu0 0
        %1625 = vmatpush1.bf16.msra.mxu0 0
        %1626 = vmatprep.mubr.bf16.mxu0 0
        %1627 = vmatmul.mubr.bf16.gmra.mrb[0].mxu0 %v1510
        %v1628 = vpop.f32.mrb[0].mxu0
        %v1629 = vadd.f32 0.0, %v1628
        %v1630 = vpop.f32.mrb[0].mxu0
        %v1631 = vadd.f32 0.0, %v1630
        %v1632 = vpop.f32.mrb[0].mxu0
        %v1633 = vadd.f32 0.0, %v1632
        %v1634 = vpop.f32.mrb[0].mxu0
        %v1635 = vadd.f32 0.0, %v1634
        %1636 = vmatprep.mubr.bf16.mxu0 0
        %1637 = vmatmul.mubr.bf16.gmra.mrb[0].mxu0 %v1513
        %v1638 = vpop.f32.mrb[0].mxu0
        %v1639 = vadd.f32 0.0, %v1638
        %v1640 = vpop.f32.mrb[0].mxu0
        %v1641 = vadd.f32 0.0, %v1640
        %v1642 = vpop.f32.mrb[0].mxu0
        %v1643 = vadd.f32 0.0, %v1642
        %v1644 = vpop.f32.mrb[0].mxu0
        %v1645 = vadd.f32 0.0, %v1644
        %1646 = vmatprep.mubr.bf16.mxu0 0
        %1647 = vmatmul.mubr.bf16.gmra.mrb[0].mxu0 %v1516
        %v1648 = vpop.f32.mrb[0].mxu0
        %v1649 = vadd.f32 0.0, %v1648
        %v1650 = vpop.f32.mrb[0].mxu0
        %v1651 = vadd.f32 0.0, %v1650
        %v1652 = vpop.f32.mrb[0].mxu0
        %v1653 = vadd.f32 0.0, %v1652
        %v1654 = vpop.f32.mrb[0].mxu0
        %v1655 = vadd.f32 0.0, %v1654
        %1656 = vmatprep.mubr.bf16.mxu0 0
        %1657 = vmatmul.mubr.bf16.gmra.mrb[0].mxu0 %v1519
        %v1658 = vpop.f32.mrb[0].mxu0
        %v1659 = vadd.f32 0.0, %v1658
        %v1660 = vpop.f32.mrb[0].mxu0
        %v1661 = vadd.f32 0.0, %v1660
        %v1662 = vpop.f32.mrb[0].mxu0
        %v1663 = vadd.f32 0.0, %v1662
        %v1664 = vpop.f32.mrb[0].mxu0
        %v1665 = vadd.f32 0.0, %v1664
        %1666 = vdwg.mxu0
        %1667 = vmatprep.subr.bf16.mxu0 %v1462
        %1668 = vmatpush1.bf16.msra.mxu0 %v1461
        %1669 = vmatprep.subr.bf16.mxu0 %v1470
        %1670 = vmatpush1.bf16.msra.mxu0 %v1469
        %1671 = vmatprep.subr.bf16.mxu0 %v1478
        %1672 = vmatpush1.bf16.msra.mxu0 %v1477
        %1673 = vmatprep.subr.bf16.mxu0 %v1486
        %1674 = vmatpush1.bf16.msra.mxu0 %v1485
        %1675 = vmatprep.subr.bf16.mxu0 0
        %1676 = vmatpush1.bf16.msra.mxu0 0
        %1677 = vmatprep.subr.bf16.mxu0 0
        %1678 = vmatpush1.bf16.msra.mxu0 0
        %1679 = vmatprep.subr.bf16.mxu0 0
        %1680 = vmatpush1.bf16.msra.mxu0 0
        %1681 = vmatprep.subr.bf16.mxu0 0
        %1682 = vmatpush1.bf16.msra.mxu0 0
        %1683 = vmatprep.subr.bf16.mxu0 0
        %1684 = vmatpush1.bf16.msra.mxu0 0
        %1685 = vmatprep.subr.bf16.mxu0 0
        %1686 = vmatpush1.bf16.msra.mxu0 0
        %1687 = vmatprep.subr.bf16.mxu0 0
        %1688 = vmatpush1.bf16.msra.mxu0 0
        %1689 = vmatprep.subr.bf16.mxu0 0
        %1690 = vmatpush1.bf16.msra.mxu0 0
        %1691 = vmatprep.subr.bf16.mxu0 0
        %1692 = vmatpush1.bf16.msra.mxu0 0
        %1693 = vmatprep.subr.bf16.mxu0 0
        %1694 = vmatpush1.bf16.msra.mxu0 0
        %1695 = vmatprep.subr.bf16.mxu0 0
        %1696 = vmatpush1.bf16.msra.mxu0 0
        %1697 = vmatprep.subr.bf16.mxu0 0
        %1698 = vmatpush1.bf16.msra.mxu0 0
        %1699 = vmatprep.mubr.bf16.mxu0 0
        %1700 = vmatmul.mubr.bf16.gmra.mrb[0].mxu0 %v1510
        %v1701 = vpop.f32.mrb[0].mxu0
        %v1702 = vadd.f32 0.0, %v1701
        %v1703 = vpop.f32.mrb[0].mxu0
        %v1704 = vadd.f32 0.0, %v1703
        %v1705 = vpop.f32.mrb[0].mxu0
        %v1706 = vadd.f32 0.0, %v1705
        %v1707 = vpop.f32.mrb[0].mxu0
        %v1708 = vadd.f32 0.0, %v1707
        %1709 = vmatprep.mubr.bf16.mxu0 0
        %1710 = vmatmul.mubr.bf16.gmra.mrb[0].mxu0 %v1513
        %v1711 = vpop.f32.mrb[0].mxu0
        %v1712 = vadd.f32 0.0, %v1711
        %v1713 = vpop.f32.mrb[0].mxu0
        %v1714 = vadd.f32 0.0, %v1713
        %v1715 = vpop.f32.mrb[0].mxu0
        %v1716 = vadd.f32 0.0, %v1715
        %v1717 = vpop.f32.mrb[0].mxu0
        %v1718 = vadd.f32 0.0, %v1717
        %1719 = vmatprep.mubr.bf16.mxu0 0
        %1720 = vmatmul.mubr.bf16.gmra.mrb[0].mxu0 %v1516
        %v1721 = vpop.f32.mrb[0].mxu0
        %v1722 = vadd.f32 0.0, %v1721
        %v1723 = vpop.f32.mrb[0].mxu0
        %v1724 = vadd.f32 0.0, %v1723
        %v1725 = vpop.f32.mrb[0].mxu0
        %v1726 = vadd.f32 0.0, %v1725
        %v1727 = vpop.f32.mrb[0].mxu0
        %v1728 = vadd.f32 0.0, %v1727
        %1729 = vmatprep.mubr.bf16.mxu0 0
        %1730 = vmatmul.mubr.bf16.gmra.mrb[0].mxu0 %v1519
        %v1731 = vpop.f32.mrb[0].mxu0
        %v1732 = vadd.f32 0.0, %v1731
        %v1733 = vpop.f32.mrb[0].mxu0
        %v1734 = vadd.f32 0.0, %v1733
        %v1735 = vpop.f32.mrb[0].mxu0
        %v1736 = vadd.f32 0.0, %v1735
        %v1737 = vpop.f32.mrb[0].mxu0
        %v1738 = vadd.f32 0.0, %v1737
        %1739 = vdwg.mxu0
        %1740 = vmatprep.subr.bf16.mxu0 %v1464
        %1741 = vmatpush1.bf16.msra.mxu0 %v1463
        %1742 = vmatprep.subr.bf16.mxu0 %v1472
        %1743 = vmatpush1.bf16.msra.mxu0 %v1471
        %1744 = vmatprep.subr.bf16.mxu0 %v1480
        %1745 = vmatpush1.bf16.msra.mxu0 %v1479
        %1746 = vmatprep.subr.bf16.mxu0 %v1488
        %1747 = vmatpush1.bf16.msra.mxu0 %v1487
        %1748 = vmatprep.subr.bf16.mxu0 0
        %1749 = vmatpush1.bf16.msra.mxu0 0
        %1750 = vmatprep.subr.bf16.mxu0 0
        %1751 = vmatpush1.bf16.msra.mxu0 0
        %1752 = vmatprep.subr.bf16.mxu0 0
        %1753 = vmatpush1.bf16.msra.mxu0 0
        %1754 = vmatprep.subr.bf16.mxu0 0
        %1755 = vmatpush1.bf16.msra.mxu0 0
        %1756 = vmatprep.subr.bf16.mxu0 0
        %1757 = vmatpush1.bf16.msra.mxu0 0
        %1758 = vmatprep.subr.bf16.mxu0 0
        %1759 = vmatpush1.bf16.msra.mxu0 0
        %1760 = vmatprep.subr.bf16.mxu0 0
        %1761 = vmatpush1.bf16.msra.mxu0 0
        %1762 = vmatprep.subr.bf16.mxu0 0
        %1763 = vmatpush1.bf16.msra.mxu0 0
        %1764 = vmatprep.subr.bf16.mxu0 0
        %1765 = vmatpush1.bf16.msra.mxu0 0
        %1766 = vmatprep.subr.bf16.mxu0 0
        %1767 = vmatpush1.bf16.msra.mxu0 0
        %1768 = vmatprep.subr.bf16.mxu0 0
        %1769 = vmatpush1.bf16.msra.mxu0 0
        %1770 = vmatprep.subr.bf16.mxu0 0
        %1771 = vmatpush1.bf16.msra.mxu0 0
        %1772 = vmatprep.mubr.bf16.mxu0 0
        %1773 = vmatmul.mubr.bf16.gmra.mrb[0].mxu0 %v1510
        %v1774 = vpop.f32.mrb[0].mxu0
        %v1775 = vadd.f32 0.0, %v1774
        %v1776 = vpop.f32.mrb[0].mxu0
        %v1777 = vadd.f32 0.0, %v1776
        %v1778 = vpop.f32.mrb[0].mxu0
        %v1779 = vadd.f32 0.0, %v1778
        %v1780 = vpop.f32.mrb[0].mxu0
        %v1781 = vadd.f32 0.0, %v1780
        %1782 = vmatprep.mubr.bf16.mxu0 0
        %1783 = vmatmul.mubr.bf16.gmra.mrb[0].mxu0 %v1513
        %v1784 = vpop.f32.mrb[0].mxu0
        %v1785 = vadd.f32 0.0, %v1784
        %v1786 = vpop.f32.mrb[0].mxu0
        %v1787 = vadd.f32 0.0, %v1786
        %v1788 = vpop.f32.mrb[0].mxu0
        %v1789 = vadd.f32 0.0, %v1788
        %v1790 = vpop.f32.mrb[0].mxu0
        %v1791 = vadd.f32 0.0, %v1790
        %1792 = vmatprep.mubr.bf16.mxu0 0
        %1793 = vmatmul.mubr.bf16.gmra.mrb[0].mxu0 %v1516
        %v1794 = vpop.f32.mrb[0].mxu0
        %v1795 = vadd.f32 0.0, %v1794
        %v1796 = vpop.f32.mrb[0].mxu0
        %v1797 = vadd.f32 0.0, %v1796
        %v1798 = vpop.f32.mrb[0].mxu0
        %v1799 = vadd.f32 0.0, %v1798
        %v1800 = vpop.f32.mrb[0].mxu0
        %v1801 = vadd.f32 0.0, %v1800
        %1802 = vmatprep.mubr.bf16.mxu0 0
        %1803 = vmatmul.mubr.bf16.gmra.mrb[0].mxu0 %v1519
        %v1804 = vpop.f32.mrb[0].mxu0
        %v1805 = vadd.f32 0.0, %v1804
        %v1806 = vpop.f32.mrb[0].mxu0
        %v1807 = vadd.f32 0.0, %v1806
        %v1808 = vpop.f32.mrb[0].mxu0
        %v1809 = vadd.f32 0.0, %v1808
        %v1810 = vpop.f32.mrb[0].mxu0
        %v1811 = vadd.f32 0.0, %v1810
        %1812 = vdwg.mxu0
        %v1813 = vmax.f32 %v1556, 0.0
        %v1814 = vmax.f32 %v1558, 0.0
        %v1815 = vmax.f32 %v1629, 0.0
        %v1816 = vmax.f32 %v1631, 0.0
        %v1817 = vmax.f32 %v1702, 0.0
        %v1818 = vmax.f32 %v1704, 0.0
        %v1819 = vmax.f32 %v1775, 0.0
        %v1820 = vmax.f32 %v1777, 0.0
        %v1821 = vmax.f32 %v1560, 0.0
        %v1822 = vmax.f32 %v1562, 0.0
        %v1823 = vmax.f32 %v1633, 0.0
        %v1824 = vmax.f32 %v1635, 0.0
        %v1825 = vmax.f32 %v1706, 0.0
        %v1826 = vmax.f32 %v1708, 0.0
        %v1827 = vmax.f32 %v1779, 0.0
        %v1828 = vmax.f32 %v1781, 0.0
        %v1829 = vmax.f32 %v1566, 0.0
        %v1830 = vmax.f32 %v1568, 0.0
        %v1831 = vmax.f32 %v1639, 0.0
        %v1832 = vmax.f32 %v1641, 0.0
        %v1833 = vmax.f32 %v1712, 0.0
        %v1834 = vmax.f32 %v1714, 0.0
        %v1835 = vmax.f32 %v1785, 0.0
        %v1836 = vmax.f32 %v1787, 0.0
        %v1837 = vmax.f32 %v1570, 0.0
        %v1838 = vmax.f32 %v1572, 0.0
        %v1839 = vmax.f32 %v1643, 0.0
        %v1840 = vmax.f32 %v1645, 0.0
        %v1841 = vmax.f32 %v1716, 0.0
        %v1842 = vmax.f32 %v1718, 0.0
        %v1843 = vmax.f32 %v1789, 0.0
        %v1844 = vmax.f32 %v1791, 0.0
        %v1845 = vmax.f32 %v1576, 0.0
        %v1846 = vmax.f32 %v1578, 0.0
        %v1847 = vmax.f32 %v1649, 0.0
        %v1848 = vmax.f32 %v1651, 0.0
        %v1849 = vmax.f32 %v1722, 0.0
        %v1850 = vmax.f32 %v1724, 0.0
        %v1851 = vmax.f32 %v1795, 0.0
        %v1852 = vmax.f32 %v1797, 0.0
        %v1853 = vmax.f32 %v1580, 0.0
        %v1854 = vmax.f32 %v1582, 0.0
        %v1855 = vmax.f32 %v1653, 0.0
        %v1856 = vmax.f32 %v1655, 0.0
        %v1857 = vmax.f32 %v1726, 0.0
        %v1858 = vmax.f32 %v1728, 0.0
        %v1859 = vmax.f32 %v1799, 0.0
        %v1860 = vmax.f32 %v1801, 0.0
        %v1861 = vmax.f32 %v1586, 0.0
        %v1862 = vmax.f32 %v1588, 0.0
        %v1863 = vmax.f32 %v1659, 0.0
        %v1864 = vmax.f32 %v1661, 0.0
        %v1865 = vmax.f32 %v1732, 0.0
        %v1866 = vmax.f32 %v1734, 0.0
        %v1867 = vmax.f32 %v1805, 0.0
        %v1868 = vmax.f32 %v1807, 0.0
        %v1869 = vmax.f32 %v1590, 0.0
        %v1870 = vmax.f32 %v1592, 0.0
        %v1871 = vmax.f32 %v1663, 0.0
        %v1872 = vmax.f32 %v1665, 0.0
        %v1873 = vmax.f32 %v1736, 0.0
        %v1874 = vmax.f32 %v1738, 0.0
        %v1875 = vmax.f32 %v1809, 0.0
        %v1876 = vmax.f32 %v1811, 0.0
        %v1877 = vld [vmem:[%s5] sm:$0x3]
        %v1878 = vpack.c.bf16 %v1821, %v1813
        %v1879 = vpack.c.bf16 %v1822, %v1814
        %v1880 = vpack.c.bf16 %v1823, %v1815
        %v1881 = vpack.c.bf16 %v1824, %v1816
        %v1882 = vpack.c.bf16 %v1825, %v1817
        %v1883 = vpack.c.bf16 %v1826, %v1818
        %v1884 = vpack.c.bf16 %v1827, %v1819
        %v1885 = vpack.c.bf16 %v1828, %v1820
        %v1886 = vpack.c.bf16 %v1837, %v1829
        %v1887 = vpack.c.bf16 %v1838, %v1830
        %v1888 = vpack.c.bf16 %v1839, %v1831
        %v1889 = vpack.c.bf16 %v1840, %v1832
        %v1890 = vpack.c.bf16 %v1841, %v1833
        %v1891 = vpack.c.bf16 %v1842, %v1834
        %v1892 = vpack.c.bf16 %v1843, %v1835
        %v1893 = vpack.c.bf16 %v1844, %v1836
        %v1894 = vpack.c.bf16 %v1853, %v1845
        %v1895 = vpack.c.bf16 %v1854, %v1846
        %v1896 = vpack.c.bf16 %v1855, %v1847
        %v1897 = vpack.c.bf16 %v1856, %v1848
        %v1898 = vpack.c.bf16 %v1857, %v1849
        %v1899 = vpack.c.bf16 %v1858, %v1850
        %v1900 = vpack.c.bf16 %v1859, %v1851
        %v1901 = vpack.c.bf16 %v1860, %v1852
        %v1902 = vpack.c.bf16 %v1869, %v1861
        %v1903 = vpack.c.bf16 %v1870, %v1862
        %v1904 = vpack.c.bf16 %v1871, %v1863
        %v1905 = vpack.c.bf16 %v1872, %v1864
        %v1906 = vpack.c.bf16 %v1873, %v1865
        %v1907 = vpack.c.bf16 %v1874, %v1866
        %v1908 = vpack.c.bf16 %v1875, %v1867
        %v1909 = vpack.c.bf16 %v1876, %v1868
        %v1911 = vsel %vm813, %v1877, 0
        %1913 = vmatprep.subr.bf16.mxu0 %v1879
        %1914 = vmatpush1.bf16.msra.mxu0 %v1878
        %1915 = vmatprep.subr.bf16.mxu0 %v1887
        %1916 = vmatpush1.bf16.msra.mxu0 %v1886
        %1917 = vmatprep.subr.bf16.mxu0 %v1895
        %1918 = vmatpush1.bf16.msra.mxu0 %v1894
        %1919 = vmatprep.subr.bf16.mxu0 %v1903
        %1920 = vmatpush1.bf16.msra.mxu0 %v1902
        %1921 = vmatprep.subr.bf16.mxu0 0
        %1922 = vmatpush1.bf16.msra.mxu0 0
        %1923 = vmatprep.subr.bf16.mxu0 0
        %1924 = vmatpush1.bf16.msra.mxu0 0
        %1925 = vmatprep.subr.bf16.mxu0 0
        %1926 = vmatpush1.bf16.msra.mxu0 0
        %1927 = vmatprep.subr.bf16.mxu0 0
        %1928 = vmatpush1.bf16.msra.mxu0 0
        %1929 = vmatprep.subr.bf16.mxu0 0
        %1930 = vmatpush1.bf16.msra.mxu0 0
        %1931 = vmatprep.subr.bf16.mxu0 0
        %1932 = vmatpush1.bf16.msra.mxu0 0
        %1933 = vmatprep.subr.bf16.mxu0 0
        %1934 = vmatpush1.bf16.msra.mxu0 0
        %1935 = vmatprep.subr.bf16.mxu0 0
        %1936 = vmatpush1.bf16.msra.mxu0 0
        %1937 = vmatprep.subr.bf16.mxu0 0
        %1938 = vmatpush1.bf16.msra.mxu0 0
        %1939 = vmatprep.subr.bf16.mxu0 0
        %1940 = vmatpush1.bf16.msra.mxu0 0
        %1941 = vmatprep.subr.bf16.mxu0 0
        %1942 = vmatpush1.bf16.msra.mxu0 0
        %1943 = vmatprep.subr.bf16.mxu0 0
        %1944 = vmatpush1.bf16.msra.mxu0 0
        %1945 = vmatprep.mubr.bf16.mxu0 0
        %1946 = vmatmul.mubr.bf16.gmra.mrb[0].mxu0 %v1911
        %v1947 = vpop.f32.mrb[0].mxu0
        %v1948 = vadd.f32 0.0, %v1947
        %v1949 = vpop.f32.mrb[0].mxu0
        %v1950 = vadd.f32 0.0, %v1949
        %v1951 = vpop.f32.mrb[0].mxu0
        %v1952 = vpop.f32.mrb[0].mxu0
        %1953 = vdwg.mxu0
        %1954 = vmatprep.subr.bf16.mxu0 %v1881
        %1955 = vmatpush1.bf16.msra.mxu0 %v1880
        %1956 = vmatprep.subr.bf16.mxu0 %v1889
        %1957 = vmatpush1.bf16.msra.mxu0 %v1888
        %1958 = vmatprep.subr.bf16.mxu0 %v1897
        %1959 = vmatpush1.bf16.msra.mxu0 %v1896
        %1960 = vmatprep.subr.bf16.mxu0 %v1905
        %1961 = vmatpush1.bf16.msra.mxu0 %v1904
        %1962 = vmatprep.subr.bf16.mxu0 0
        %1963 = vmatpush1.bf16.msra.mxu0 0
        %1964 = vmatprep.subr.bf16.mxu0 0
        %1965 = vmatpush1.bf16.msra.mxu0 0
        %1966 = vmatprep.subr.bf16.mxu0 0
        %1967 = vmatpush1.bf16.msra.mxu0 0
        %1968 = vmatprep.subr.bf16.mxu0 0
        %1969 = vmatpush1.bf16.msra.mxu0 0
        %1970 = vmatprep.subr.bf16.mxu0 0
        %1971 = vmatpush1.bf16.msra.mxu0 0
        %1972 = vmatprep.subr.bf16.mxu0 0
        %1973 = vmatpush1.bf16.msra.mxu0 0
        %1974 = vmatprep.subr.bf16.mxu0 0
        %1975 = vmatpush1.bf16.msra.mxu0 0
        %1976 = vmatprep.subr.bf16.mxu0 0
        %1977 = vmatpush1.bf16.msra.mxu0 0
        %1978 = vmatprep.subr.bf16.mxu0 0
        %1979 = vmatpush1.bf16.msra.mxu0 0
        %1980 = vmatprep.subr.bf16.mxu0 0
        %1981 = vmatpush1.bf16.msra.mxu0 0
        %1982 = vmatprep.subr.bf16.mxu0 0
        %1983 = vmatpush1.bf16.msra.mxu0 0
        %1984 = vmatprep.subr.bf16.mxu0 0
        %1985 = vmatpush1.bf16.msra.mxu0 0
        %1986 = vmatprep.mubr.bf16.mxu0 0
        %1987 = vmatmul.mubr.bf16.gmra.mrb[0].mxu0 %v1911
        %v1988 = vpop.f32.mrb[0].mxu0
        %v1989 = vadd.f32 0.0, %v1988
        %v1990 = vpop.f32.mrb[0].mxu0
        %v1991 = vadd.f32 0.0, %v1990
        %v1992 = vpop.f32.mrb[0].mxu0
        %v1993 = vpop.f32.mrb[0].mxu0
        %1994 = vdwg.mxu0
        %1995 = vmatprep.subr.bf16.mxu0 %v1883
        %1996 = vmatpush1.bf16.msra.mxu0 %v1882
        %1997 = vmatprep.subr.bf16.mxu0 %v1891
        %1998 = vmatpush1.bf16.msra.mxu0 %v1890
        %1999 = vmatprep.subr.bf16.mxu0 %v1899
        %2000 = vmatpush1.bf16.msra.mxu0 %v1898
        %2001 = vmatprep.subr.bf16.mxu0 %v1907
        %2002 = vmatpush1.bf16.msra.mxu0 %v1906
        %2003 = vmatprep.subr.bf16.mxu0 0
        %2004 = vmatpush1.bf16.msra.mxu0 0
        %2005 = vmatprep.subr.bf16.mxu0 0
        %2006 = vmatpush1.bf16.msra.mxu0 0
        %2007 = vmatprep.subr.bf16.mxu0 0
        %2008 = vmatpush1.bf16.msra.mxu0 0
        %2009 = vmatprep.subr.bf16.mxu0 0
        %2010 = vmatpush1.bf16.msra.mxu0 0
        %2011 = vmatprep.subr.bf16.mxu0 0
        %2012 = vmatpush1.bf16.msra.mxu0 0
        %2013 = vmatprep.subr.bf16.mxu0 0
        %2014 = vmatpush1.bf16.msra.mxu0 0
        %2015 = vmatprep.subr.bf16.mxu0 0
        %2016 = vmatpush1.bf16.msra.mxu0 0
        %2017 = vmatprep.subr.bf16.mxu0 0
        %2018 = vmatpush1.bf16.msra.mxu0 0
        %2019 = vmatprep.subr.bf16.mxu0 0
        %2020 = vmatpush1.bf16.msra.mxu0 0
        %2021 = vmatprep.subr.bf16.mxu0 0
        %2022 = vmatpush1.bf16.msra.mxu0 0
        %2023 = vmatprep.subr.bf16.mxu0 0
        %2024 = vmatpush1.bf16.msra.mxu0 0
        %2025 = vmatprep.subr.bf16.mxu0 0
        %2026 = vmatpush1.bf16.msra.mxu0 0
        %2027 = vmatprep.mubr.bf16.mxu0 0
        %2028 = vmatmul.mubr.bf16.gmra.mrb[0].mxu0 %v1911
        %v2029 = vpop.f32.mrb[0].mxu0
        %v2030 = vadd.f32 0.0, %v2029
        %v2031 = vpop.f32.mrb[0].mxu0
        %v2032 = vadd.f32 0.0, %v2031
        %v2033 = vpop.f32.mrb[0].mxu0
        %v2034 = vpop.f32.mrb[0].mxu0
        %2035 = vdwg.mxu0
        %2036 = vmatprep.subr.bf16.mxu0 %v1885
        %2037 = vmatpush1.bf16.msra.mxu0 %v1884
        %2038 = vmatprep.subr.bf16.mxu0 %v1893
        %2039 = vmatpush1.bf16.msra.mxu0 %v1892
        %2040 = vmatprep.subr.bf16.mxu0 %v1901
        %2041 = vmatpush1.bf16.msra.mxu0 %v1900
        %2042 = vmatprep.subr.bf16.mxu0 %v1909
        %2043 = vmatpush1.bf16.msra.mxu0 %v1908
        %2044 = vmatprep.subr.bf16.mxu0 0
        %2045 = vmatpush1.bf16.msra.mxu0 0
        %2046 = vmatprep.subr.bf16.mxu0 0
        %2047 = vmatpush1.bf16.msra.mxu0 0
        %2048 = vmatprep.subr.bf16.mxu0 0
        %2049 = vmatpush1.bf16.msra.mxu0 0
        %2050 = vmatprep.subr.bf16.mxu0 0
        %2051 = vmatpush1.bf16.msra.mxu0 0
        %2052 = vmatprep.subr.bf16.mxu0 0
        %2053 = vmatpush1.bf16.msra.mxu0 0
        %2054 = vmatprep.subr.bf16.mxu0 0
        %2055 = vmatpush1.bf16.msra.mxu0 0
        %2056 = vmatprep.subr.bf16.mxu0 0
        %2057 = vmatpush1.bf16.msra.mxu0 0
        %2058 = vmatprep.subr.bf16.mxu0 0
        %2059 = vmatpush1.bf16.msra.mxu0 0
        %2060 = vmatprep.subr.bf16.mxu0 0
        %2061 = vmatpush1.bf16.msra.mxu0 0
        %2062 = vmatprep.subr.bf16.mxu0 0
        %2063 = vmatpush1.bf16.msra.mxu0 0
        %2064 = vmatprep.subr.bf16.mxu0 0
        %2065 = vmatpush1.bf16.msra.mxu0 0
        %2066 = vmatprep.subr.bf16.mxu0 0
        %2067 = vmatpush1.bf16.msra.mxu0 0
        %2068 = vmatprep.mubr.bf16.mxu0 0
        %2069 = vmatmul.mubr.bf16.gmra.mrb[0].mxu0 %v1911
        %v2070 = vpop.f32.mrb[0].mxu0
        %v2071 = vadd.f32 0.0, %v2070
        %v2072 = vpop.f32.mrb[0].mxu0
        %v2073 = vadd.f32 0.0, %v2072
        %v2074 = vpop.f32.mrb[0].mxu0
        %v2075 = vpop.f32.mrb[0].mxu0
        %2076 = vdwg.mxu0
        %v2077 = vxor.u32 %v1948, 2147483648
        %v2078 = vxor.u32 %v1950, 2147483648
        %v2079 = vxor.u32 %v1989, 2147483648
        %v2080 = vxor.u32 %v1991, 2147483648
        %v2081 = vxor.u32 %v2030, 2147483648
        %v2082 = vxor.u32 %v2032, 2147483648
        %v2083 = vxor.u32 %v2071, 2147483648
        %v2084 = vxor.u32 %v2073, 2147483648
        %v2085 = vmul.f32 %v2077, 1.442695
        %v2086 = vpow.pop %v2085
        %v2087 = vmul.f32 %v2078, 1.442695
        %v2088 = vpow.pop %v2087
        %v2089 = vmul.f32 %v2079, 1.442695
        %v2090 = vpow.pop %v2089
        %v2091 = vmul.f32 %v2080, 1.442695
        %v2092 = vpow.pop %v2091
        %v2093 = vmul.f32 %v2081, 1.442695
        %v2094 = vpow.pop %v2093
        %v2095 = vmul.f32 %v2082, 1.442695
        %v2096 = vpow.pop %v2095
        %v2097 = vmul.f32 %v2083, 1.442695
        %v2098 = vpow.pop %v2097
        %v2099 = vmul.f32 %v2084, 1.442695
        %v2100 = vpow.pop %v2099
        %v2101 = vadd.f32 %v2086, 1.0
        %v2102 = vadd.f32 %v2088, 1.0
        %v2103 = vadd.f32 %v2090, 1.0
        %v2104 = vadd.f32 %v2092, 1.0
        %v2105 = vadd.f32 %v2094, 1.0
        %v2106 = vadd.f32 %v2096, 1.0
        %v2107 = vadd.f32 %v2098, 1.0
        %v2108 = vadd.f32 %v2100, 1.0
        %v2109 = vrcp.pop %v2101
        %v2110 = vmul.f32 1.0, %v2109
        %v2111 = vrcp.pop %v2102
        %v2112 = vmul.f32 1.0, %v2111
        %v2113 = vrcp.pop %v2103
        %v2114 = vmul.f32 1.0, %v2113
        %v2115 = vrcp.pop %v2104
        %v2116 = vmul.f32 1.0, %v2115
        %v2117 = vrcp.pop %v2105
        %v2118 = vmul.f32 1.0, %v2117
        %v2119 = vrcp.pop %v2106
        %v2120 = vmul.f32 1.0, %v2119
        %v2121 = vrcp.pop %v2107
        %v2122 = vmul.f32 1.0, %v2121
        %v2123 = vrcp.pop %v2108
        %v2124 = vmul.f32 1.0, %v2123
        %v2125 = vlaneseq
        %v2126 = vshrl.u32 %v2125, 7
        %vm2127 = vcmp.eq.s32.totalorder %v2126, 3
        %v2128 = vlaneseq
        %v2129 = vshrl.u32 %v2128, 7
        %v2130 = vsub.s32 0, %v2129
        %v2131 = vrot.slane %v989, %v2130
        %v2132 = vlaneseq
        %v2133 = vshrl.u32 %v2132, 7
        %v2134 = vsub.s32 0, %v2133
        %v2135 = vrot.slane %v990, %v2134
        %v2136 = vlaneseq
        %v2137 = vshrl.u32 %v2136, 7
        %v2138 = vsub.s32 0, %v2137
        %v2139 = vrot.slane %v991, %v2138
        %v2140 = vlaneseq
        %v2141 = vshrl.u32 %v2140, 7
        %v2142 = vsub.s32 0, %v2141
        %v2143 = vrot.slane %v992, %v2142
        %v2144 = vlaneseq
        %v2145 = vshrl.u32 %v2144, 7
        %v2146 = vsub.s32 0, %v2145
        %v2147 = vrot.slane %v993, %v2146
        %v2148 = vlaneseq
        %v2149 = vshrl.u32 %v2148, 7
        %v2150 = vsub.s32 0, %v2149
        %v2151 = vrot.slane %v994, %v2150
        %v2152 = vlaneseq
        %v2153 = vshrl.u32 %v2152, 7
        %v2154 = vsub.s32 0, %v2153
        %v2155 = vrot.slane %v995, %v2154
        %v2156 = vlaneseq
        %v2157 = vshrl.u32 %v2156, 7
        %v2158 = vsub.s32 0, %v2157
        %v2159 = vrot.slane %v996, %v2158
        %v2160 = vsel %vm2127, %v2131, %v2110
        %v2161 = vsel %vm2127, %v2135, %v2112
        %v2162 = vsel %vm2127, %v2139, %v2114
        %v2163 = vsel %vm2127, %v2143, %v2116
        %v2164 = vsel %vm2127, %v2147, %v2118
        %v2165 = vsel %vm2127, %v2151, %v2120
        %v2166 = vsel %vm2127, %v2155, %v2122
        %v2167 = vsel %vm2127, %v2159, %v2124
        %v2176 = vcombine.low %v2160, %v2161
        %v2177 = vcombine.low %v2162, %v2163
        %v2178 = vcombine.low %v2164, %v2165
        %v2179 = vcombine.low %v2166, %v2167
        %2184 = vst [vmem:[%s269] sm:$0xff] %v2176
        %2185 = vst [vmem:[%s269 + $0x8] sm:$0xff] %v2177
        %2186 = vst [vmem:[%s269 + $0x10] sm:$0xff] %v2178
        %2187 = vst [vmem:[%s269 + $0x18] sm:$0xff] %v2179
        %s2188 = sand.u32 %s162, 1
        %s2189 = scalar_lea.sflag [#allocation4], %s2188
        %s2190 = sand.u32 %s162, 1
        %s2191 = smul.addr %s2190, 32
        %s2192 = scalar_lea.vmem [#allocation5], %s2191
        // Predicated region
        $region49: #{tpu_custom_call.1} parent=43 // pred_check
          %p2193 = pneg %p172
        $region50: #{tpu_custom_call.1} parent=43 // pred_check_branch
          %2195 = sbr.rel (%p2193) target = $region52
        $region51: #{tpu_custom_call.1} parent=43 // pred_region
          %s2196 = smul.u32 8, %s23
          %s2198 = ssub.s32 512, 512
          %2199 = vsyncadd %s2189, %s2198
          %s2200 = smul.addr %s2196, 64
          %s2201 = scalar_lea.hbm %s6, %s2200
          %s2203 = sshll.u32 %s2192, 4
          %s2204 = int_to_ptr.vmem [resolvable:$true] %s2203
          %2206 = dma.vmem_to_hbm [thread:$0]  %s2204, 512, %s2201, %s2189
        $region52: #{tpu_custom_call.1} parent=43 // pred_fallthru
          _
      $region44: #{tpu_custom_call.1} parent=5 // pred_fallthru
        _
      %p2207 = scmp.le.s32.totalorder 2, %s18
      // Predicated region
      $region53: #{tpu_custom_call.1} parent=5 // pred_check
        %p2208 = pneg %p2207
      $region54: #{tpu_custom_call.1} parent=5 // pred_check_branch
        %2210 = sbr.rel (%p2208) target = $region56
      $region55: #{tpu_custom_call.1} parent=5 // pred_region
        %s2211 = ssub.s32 %s18, 2
        // Predicated region
        $region57: #{tpu_custom_call.1} parent=55 // pred_check
          %p2212 = pneg %p178
        $region58: #{tpu_custom_call.1} parent=55 // pred_check_branch
          %2214 = sbr.rel (%p2212) target = $region60
        $region59: #{tpu_custom_call.1} parent=55 // pred_region
          %s2215 = sand.u32 %s163, 1
          %s2216 = scalar_lea.sflag [#allocation4], %s2215
          %s2217 = sand.u32 %s163, 1
          %s2218 = smul.addr %s2217, 32
          %s2219 = scalar_lea.vmem [#allocation5], %s2218
          %2220 = dma.done %s2216, 512
        $region60: #{tpu_custom_call.1} parent=55 // pred_fallthru
          _
      $region56: #{tpu_custom_call.1} parent=5 // pred_fallthru
        _
    $region6: #{tpu_custom_call.1} parent=1 // loop_footer
      %s22 = sadd.s32 1, %s18
    $region7: #{tpu_custom_call.1} parent=1 // loop_footer_branch
      %17 = sbr.rel target = $region3
    $region8: #{tpu_custom_call.1} parent=1 // loop_exit
      _
    %2221 = vsyncpa [#allocation3], 1
    %s2222 = scalar_lea.sflag [#allocation3], 1
    %2223 = vsyncpa %s2222, 1
    %2224 = vsyncpa [#allocation4], 1
    %s2225 = scalar_lea.sflag [#allocation4], 1
    %2226 = vsyncpa %s2225, 1

</llo_original>
